<compile_context>
chip_gen: v7x
topology: tpu7x:2x2x1
jax: 0.10.0
libtpu: 0.0.40
codegen_flags: <defaults>
</compile_context>

<pallas_src>
import numpy as np
import jax
import jax.numpy as jnp
from jax.experimental import pallas as pl
from jax.experimental.pallas import tpu as pltpu


def _nearest_idx(out_size: int, in_size: int) -> np.ndarray:
    # PyTorch 'nearest' mode: src = floor(dst * in / out)
    return (np.arange(out_size) * in_size) // out_size


def _depth_runs(d_src: np.ndarray):
    """Group consecutive output depths that read the same input depth.

    Returns a list of (src_depth, first_out_depth, run_length), all static ints.
    """
    runs = []
    for d_out, src in enumerate(d_src):
        src = int(src)
        if runs and runs[-1][0] == src:
            runs[-1][2] += 1
        else:
            runs.append([src, d_out, 1])
    return [tuple(r) for r in runs]


def _pick_tile(nc: int, in_row_bytes: int, out_row_bytes: int,
               budget_bytes: int = 20 << 20, min_out_block: int = 512 << 10) -> int:
    """Pick TNC (rows of N*C per grid step).

    Keeps double-buffered input+output blocks under ~20 MiB (fits v7x's 64 MiB
    VMEM with headroom, and v5e/v6e trivially), aims for >=512 KiB output blocks,
    and prefers >=2 grid blocks (megacore) when that doesn't shrink blocks below
    the target.
    """
    per_row = 2 * (in_row_bytes + out_row_bytes)   # double-buffered in + out
    cap = max(1, min(nc, budget_bytes // max(per_row, 1)))
    divisors = [d for d in range(1, nc + 1) if nc % d == 0]
    tnc = max(d for d in divisors if d <= cap)
    if tnc == nc and len(divisors) > 1:
        for d in sorted(divisors[:-1], reverse=True):
            if d * out_row_bytes >= min_out_block:
                tnc = d
                break
    return tnc


def _make_upsample_kernel(runs):
    """Kernel over a (TNC, D_in, S_in) input block and (TNC, D_out, S_out) output block."""

    def kernel(x_ref, g_ref, o_ref):
        g = g_ref[...]                                   # (S_in, S_out) one-hot gather
        for src, start, length in runs:                  # static Python unroll over D_in
            # Fused H+W nearest gather for one input depth slice, all TNC rows at once.
            z = jnp.dot(x_ref[:, src, :], g,
                        preferred_element_type=jnp.float32).astype(o_ref.dtype)
            # Depth replication: write this slice to every output depth that maps to it.
            for k in range(length):
                o_ref[:, start + k, :] = z

    return kernel


def abstract_upsampling_forward(encoder_features, x):
    """Nearest-neighbor upsample `x` (NCDHW) to encoder_features' spatial size."""
    N, C, D_in, H_in, W_in = x.shape
    D_out, H_out, W_out = encoder_features.shape[2:]
    NC = N * C
    S_in = H_in * W_in
    S_out = H_out * W_out

    # Static nearest-neighbor index tables.
    d_src = _nearest_idx(D_out, D_in)
    h_src = _nearest_idx(H_out, H_in)
    w_src = _nearest_idx(W_out, W_in)

    # Fused (H,W) one-hot gather matrix in the input's compute dtype.
    compute_dtype = jnp.bfloat16 if x.dtype == jnp.bfloat16 else jnp.float32
    g_np = np.zeros((S_in, S_out), dtype=np.float32)
    rows = (h_src[:, None] * W_in + w_src[None, :]).reshape(-1)   # (S_out,)
    g_np[rows, np.arange(S_out)] = 1.0
    g = jnp.asarray(g_np, dtype=compute_dtype)

    # Lane-dense layouts (free row-major reshapes outside the kernel).
    x2 = x.reshape(NC, D_in, S_in)

    itemsize = np.dtype(x.dtype).itemsize
    in_row = D_in * S_in * itemsize
    out_row = D_out * S_out * itemsize
    tnc = _pick_tile(NC, in_row, out_row)
    grid = (NC // tnc,)

    g_bytes = int(np.prod(g.shape)) * np.dtype(compute_dtype).itemsize
    vmem_needed = 2 * tnc * (in_row + out_row) + 2 * g_bytes
    vmem_limit = int(min(max(vmem_needed + (4 << 20), 16 << 20), 48 << 20))

    kernel = _make_upsample_kernel(_depth_runs(d_src))

    out2 = pl.pallas_call(
        kernel,
        out_shape=jax.ShapeDtypeStruct((NC, D_out, S_out), x.dtype),
        grid=grid,
        in_specs=[
            pl.BlockSpec((tnc, D_in, S_in), lambda i: (i, 0, 0)),
            # Constant across the grid; tiny, so default buffering is fine
            # (pipeline_mode=pl.Buffered(1) would reclaim its duplicate buffer).
            pl.BlockSpec((S_in, S_out), lambda i: (0, 0)),
        ],
        out_specs=pl.BlockSpec((tnc, D_out, S_out), lambda i: (i, 0, 0)),
        compiler_params=pltpu.CompilerParams(
            dimension_semantics=("parallel",),
            vmem_limit_bytes=vmem_limit),
    )(x2, g)

    return out2.reshape(N, C, D_out, H_out, W_out)


def _reference(encoder_features, x):
    # Pure-JAX nearest-neighbor reference.
    N, C, D_in, H_in, W_in = x.shape
    D_out, H_out, W_out = encoder_features.shape[2:]
    d = _nearest_idx(D_out, D_in)
    h = _nearest_idx(H_out, H_in)
    w = _nearest_idx(W_out, W_in)
    return x[:, :, d][:, :, :, h][:, :, :, :, w]


if __name__ == "__main__":
    key = jax.random.PRNGKey(0)
    k1, k2 = jax.random.split(key)
    # encoder_features supplies only its spatial size (channels may differ from x).
    encoder_features = jax.random.normal(k1, (2, 4, 8, 16, 16), dtype=jnp.float32)
    x = jax.random.normal(k2, (2, 8, 4, 8, 8), dtype=jnp.float32)

    out = abstract_upsampling_forward(encoder_features, x)
    out = jax.block_until_ready(out)

    ref = _reference(encoder_features, x)
    assert out.shape == (2, 8, 8, 16, 16), out.shape
    np.testing.assert_allclose(np.asarray(out), np.asarray(ref), rtol=0, atol=0)
    print("KERNEL_OK")
</pallas_src>

<mosaic_0001>
module attributes {stable_mosaic.version = 11 : i64} {
  func.func @kernel(%arg0: i32, %arg1: memref<16x4x64xf32, #tpu.memory_space<vmem>>, %arg2: memref<64x256xf32, #tpu.memory_space<vmem>>, %arg3: memref<16x8x256xf32, #tpu.memory_space<vmem>>) attributes {dimension_semantics = [#tpu.dimension_semantics<parallel>], iteration_bounds = array<i64: 1>, scalar_prefetch = 0 : i64, scratch_operands = 0 : i64, tpu.core_type = #tpu.core_type<tc>, window_params = [{transform_indices = @transform_0, window_bounds = array<i64: 16, 4, 64>}, {pipeline_mode = #tpu.pipeline_mode<synchronous>, transform_indices = @transform_1, window_bounds = array<i64: 64, 256>}, {transform_indices = @transform_2, window_bounds = array<i64: 16, 8, 256>}]} {
    %c0 = arith.constant 0 : index
    %c0_0 = arith.constant 0 : index
    %0 = vector.load %arg2[%c0, %c0_0] : memref<64x256xf32, #tpu.memory_space<vmem>>, vector<64x256xf32>
    %c0_1 = arith.constant 0 : index
    %c0_2 = arith.constant 0 : index
    %c0_3 = arith.constant 0 : index
    %1 = vector.load %arg1[%c0_1, %c0_2, %c0_3] : memref<16x4x64xf32, #tpu.memory_space<vmem>>, vector<16x1x64xf32>
    %2 = vector.shape_cast %1 : vector<16x1x64xf32> to vector<16x64xf32>
    %cst = arith.constant dense<0.000000e+00> : vector<16x256xf32>
    %3 = tpu.matmul %2, %0, %cst {dimension_numbers = #tpu.dot_dimension_numbers<[1], [0], [0], [1], [0, 0, 1, 1], [], []>} : vector<16x64xf32>, vector<64x256xf32>, vector<16x256xf32> -> vector<16x256xf32>
    %c0_4 = arith.constant 0 : index
    %c0_5 = arith.constant 0 : index
    %c0_6 = arith.constant 0 : index
    %4 = vector.load %arg3[%c0_4, %c0_5, %c0_6] : memref<16x8x256xf32, #tpu.memory_space<vmem>>, vector<16x1x256xf32>
    %5 = vector.shape_cast %4 : vector<16x1x256xf32> to vector<16x256xf32>
    %6 = vector.shape_cast %3 : vector<16x256xf32> to vector<16x1x256xf32>
    tpu.vector_store %arg3[%c0_4, %c0_5, %c0_6], %6 {strides = array<i32>} : memref<16x8x256xf32, #tpu.memory_space<vmem>>, vector<16x1x256xf32>,
    %c0_7 = arith.constant 0 : index
    %c1 = arith.constant 1 : index
    %c0_8 = arith.constant 0 : index
    %7 = vector.load %arg3[%c0_7, %c1, %c0_8] : memref<16x8x256xf32, #tpu.memory_space<vmem>>, vector<16x1x256xf32>
    %8 = vector.shape_cast %7 : vector<16x1x256xf32> to vector<16x256xf32>
    %9 = vector.shape_cast %3 : vector<16x256xf32> to vector<16x1x256xf32>
    tpu.vector_store %arg3[%c0_7, %c1, %c0_8], %9 {strides = array<i32>} : memref<16x8x256xf32, #tpu.memory_space<vmem>>, vector<16x1x256xf32>,
    %c0_9 = arith.constant 0 : index
    %c1_10 = arith.constant 1 : index
    %c0_11 = arith.constant 0 : index
    %10 = vector.load %arg1[%c0_9, %c1_10, %c0_11] : memref<16x4x64xf32, #tpu.memory_space<vmem>>, vector<16x1x64xf32>
    %11 = vector.shape_cast %10 : vector<16x1x64xf32> to vector<16x64xf32>
    %cst_12 = arith.constant dense<0.000000e+00> : vector<16x256xf32>
    %12 = tpu.matmul %11, %0, %cst_12 {dimension_numbers = #tpu.dot_dimension_numbers<[1], [0], [0], [1], [0, 0, 1, 1], [], []>} : vector<16x64xf32>, vector<64x256xf32>, vector<16x256xf32> -> vector<16x256xf32>
    %c0_13 = arith.constant 0 : index
    %c2 = arith.constant 2 : index
    %c0_14 = arith.constant 0 : index
    %13 = vector.load %arg3[%c0_13, %c2, %c0_14] : memref<16x8x256xf32, #tpu.memory_space<vmem>>, vector<16x1x256xf32>
    %14 = vector.shape_cast %13 : vector<16x1x256xf32> to vector<16x256xf32>
    %15 = vector.shape_cast %12 : vector<16x256xf32> to vector<16x1x256xf32>
    tpu.vector_store %arg3[%c0_13, %c2, %c0_14], %15 {strides = array<i32>} : memref<16x8x256xf32, #tpu.memory_space<vmem>>, vector<16x1x256xf32>,
    %c0_15 = arith.constant 0 : index
    %c3 = arith.constant 3 : index
    %c0_16 = arith.constant 0 : index
    %16 = vector.load %arg3[%c0_15, %c3, %c0_16] : memref<16x8x256xf32, #tpu.memory_space<vmem>>, vector<16x1x256xf32>
    %17 = vector.shape_cast %16 : vector<16x1x256xf32> to vector<16x256xf32>
    %18 = vector.shape_cast %12 : vector<16x256xf32> to vector<16x1x256xf32>
    tpu.vector_store %arg3[%c0_15, %c3, %c0_16], %18 {strides = array<i32>} : memref<16x8x256xf32, #tpu.memory_space<vmem>>, vector<16x1x256xf32>,
    %c0_17 = arith.constant 0 : index
    %c2_18 = arith.constant 2 : index
    %c0_19 = arith.constant 0 : index
    %19 = vector.load %arg1[%c0_17, %c2_18, %c0_19] : memref<16x4x64xf32, #tpu.memory_space<vmem>>, vector<16x1x64xf32>
    %20 = vector.shape_cast %19 : vector<16x1x64xf32> to vector<16x64xf32>
    %cst_20 = arith.constant dense<0.000000e+00> : vector<16x256xf32>
    %21 = tpu.matmul %20, %0, %cst_20 {dimension_numbers = #tpu.dot_dimension_numbers<[1], [0], [0], [1], [0, 0, 1, 1], [], []>} : vector<16x64xf32>, vector<64x256xf32>, vector<16x256xf32> -> vector<16x256xf32>
    %c0_21 = arith.constant 0 : index
    %c4 = arith.constant 4 : index
    %c0_22 = arith.constant 0 : index
    %22 = vector.load %arg3[%c0_21, %c4, %c0_22] : memref<16x8x256xf32, #tpu.memory_space<vmem>>, vector<16x1x256xf32>
    %23 = vector.shape_cast %22 : vector<16x1x256xf32> to vector<16x256xf32>
    %24 = vector.shape_cast %21 : vector<16x256xf32> to vector<16x1x256xf32>
    tpu.vector_store %arg3[%c0_21, %c4, %c0_22], %24 {strides = array<i32>} : memref<16x8x256xf32, #tpu.memory_space<vmem>>, vector<16x1x256xf32>,
    %c0_23 = arith.constant 0 : index
    %c5 = arith.constant 5 : index
    %c0_24 = arith.constant 0 : index
    %25 = vector.load %arg3[%c0_23, %c5, %c0_24] : memref<16x8x256xf32, #tpu.memory_space<vmem>>, vector<16x1x256xf32>
    %26 = vector.shape_cast %25 : vector<16x1x256xf32> to vector<16x256xf32>
    %27 = vector.shape_cast %21 : vector<16x256xf32> to vector<16x1x256xf32>
    tpu.vector_store %arg3[%c0_23, %c5, %c0_24], %27 {strides = array<i32>} : memref<16x8x256xf32, #tpu.memory_space<vmem>>, vector<16x1x256xf32>,
    %c0_25 = arith.constant 0 : index
    %c3_26 = arith.constant 3 : index
    %c0_27 = arith.constant 0 : index
    %28 = vector.load %arg1[%c0_25, %c3_26, %c0_27] : memref<16x4x64xf32, #tpu.memory_space<vmem>>, vector<16x1x64xf32>
    %29 = vector.shape_cast %28 : vector<16x1x64xf32> to vector<16x64xf32>
    %cst_28 = arith.constant dense<0.000000e+00> : vector<16x256xf32>
    %30 = tpu.matmul %29, %0, %cst_28 {dimension_numbers = #tpu.dot_dimension_numbers<[1], [0], [0], [1], [0, 0, 1, 1], [], []>} : vector<16x64xf32>, vector<64x256xf32>, vector<16x256xf32> -> vector<16x256xf32>
    %c0_29 = arith.constant 0 : index
    %c6 = arith.constant 6 : index
    %c0_30 = arith.constant 0 : index
    %31 = vector.load %arg3[%c0_29, %c6, %c0_30] : memref<16x8x256xf32, #tpu.memory_space<vmem>>, vector<16x1x256xf32>
    %32 = vector.shape_cast %31 : vector<16x1x256xf32> to vector<16x256xf32>
    %33 = vector.shape_cast %30 : vector<16x256xf32> to vector<16x1x256xf32>
    tpu.vector_store %arg3[%c0_29, %c6, %c0_30], %33 {strides = array<i32>} : memref<16x8x256xf32, #tpu.memory_space<vmem>>, vector<16x1x256xf32>,
    %c0_31 = arith.constant 0 : index
    %c7 = arith.constant 7 : index
    %c0_32 = arith.constant 0 : index
    %34 = vector.load %arg3[%c0_31, %c7, %c0_32] : memref<16x8x256xf32, #tpu.memory_space<vmem>>, vector<16x1x256xf32>
    %35 = vector.shape_cast %34 : vector<16x1x256xf32> to vector<16x256xf32>
    %36 = vector.shape_cast %30 : vector<16x256xf32> to vector<16x1x256xf32>
    tpu.vector_store %arg3[%c0_31, %c7, %c0_32], %36 {strides = array<i32>} : memref<16x8x256xf32, #tpu.memory_space<vmem>>, vector<16x1x256xf32>,
    return
  }
  func.func @transform_0(%arg0: i32) -> (i32, i32, i32) {
    %c0_i32 = arith.constant 0 : i32
    %c0_i32_0 = arith.constant 0 : i32
    %c0_i32_1 = arith.constant 0 : i32
    return %arg0, %c0_i32, %c0_i32_0 : i32, i32, i32
  }
  func.func @transform_1(%arg0: i32) -> (i32, i32) {
    %c0_i32 = arith.constant 0 : i32
    %c0_i32_0 = arith.constant 0 : i32
    %c0_i32_1 = arith.constant 0 : i32
    return %c0_i32, %c0_i32_0 : i32, i32
  }
  func.func @transform_2(%arg0: i32) -> (i32, i32, i32) {
    %c0_i32 = arith.constant 0 : i32
    %c0_i32_0 = arith.constant 0 : i32
    %c0_i32_1 = arith.constant 0 : i32
    return %arg0, %c0_i32, %c0_i32_0 : i32, i32, i32
  }
}

</mosaic_0001>

<llo_original>
// kernel: tpu_custom_call.1
$region0: #{tpu_custom_call.1}
  #allocation0 [shape = 'u32[]', space=smem, size = 0x4, offset = 0x4, fixed_abs, tag = 'smem constant byte address 0x4 - core index']
  #allocation1 [shape = 'u32[144,128]{1,0:T(1,128)}', space=vmem, size = 0x12000, scoped, tag = 'internal scratch']
  %s0 = inlined_call_operand.hbm [shape: f32[16,4,64], index: 0, kind: input, shape index: {}]
  %s1 = inlined_call_operand.hbm [shape: f32[64,256], index: 1, kind: input, shape index: {}]
  %s2 = inlined_call_operand.hbm [shape: f32[16,8,256], index: 2, kind: output, shape index: {}]
  %s3 = sld [smem:[#allocation0]]
  $region26: #{tpu_custom_call.1} parent=0
    _
  %s5 = ssub.s32 1, %s3
  %s6 = scalar_select 0, %s5, %s3
  $region1: #{tpu_custom_call.1} parent=0
    #allocation2 [shape = 'u8[32768]{0}', space=vmem, size = 0x8000, scoped, tag = 'input window, operand 0, single buffered']
    #allocation3 [shape = 's32[1]{0}', space=sflag, size = 0x4, scoped, tag = 'scoped memory for tpu_custom_call.1']
    #allocation4 [shape = 's32[1]{0}', space=sflag, size = 0x4, scoped, tag = 'scoped memory for tpu_custom_call.1']
    #allocation5 [shape = 'u8[65536]{0}', space=vmem, size = 0x10000, scoped, tag = 'input window, operand 1, single buffered']
    #allocation6 [shape = 's32[1]{0}', space=sflag, size = 0x4, scoped, tag = 'scoped memory for tpu_custom_call.1']
    #allocation7 [shape = 'u8[131072]{0}', space=vmem, size = 0x20000, scoped, tag = 'output window, operand 0, single buffered']
    %7 = vsyncpa [#allocation3], 0
    %8 = vsyncpa [#allocation6], 0
    %9 = vsyncpa [#allocation4], 0
    // Predicated region
    $region2: #{tpu_custom_call.1} parent=1 // pred_check
      _
    $region3: #{tpu_custom_call.1} parent=1 // pred_check_branch
      %11 = sbr.rel (0) target = $region5
    $region4: #{tpu_custom_call.1} parent=1 // pred_region
      %s13 = ssub.s32 1024, 1024
      %14 = vsyncadd [#allocation3], %s13
      %s15 = sshll.u32 [#allocation2], 4
      %s16 = int_to_ptr.vmem [resolvable:$true] %s15
      %21 = dma.hbm_to_vmem [thread:$0]  %s0, 1024, %s16, [#allocation3], 64, 64, 4
    $region5: #{tpu_custom_call.1} parent=1 // pred_fallthru
      _
    // Predicated region
    $region6: #{tpu_custom_call.1} parent=1 // pred_check
      _
    $region7: #{tpu_custom_call.1} parent=1 // pred_check_branch
      %23 = sbr.rel (0) target = $region9
    $region8: #{tpu_custom_call.1} parent=1 // pred_region
      %s25 = ssub.s32 2048, 2048
      %26 = vsyncadd [#allocation6], %s25
      %s27 = sshll.u32 [#allocation5], 4
      %s28 = int_to_ptr.vmem [resolvable:$true] %s27
      %33 = dma.hbm_to_vmem [thread:$0]  %s1, 2048, %s28, [#allocation6], 256, 256, 16
    $region9: #{tpu_custom_call.1} parent=1 // pred_fallthru
      _
    // Predicated region
    $region10: #{tpu_custom_call.1} parent=1 // pred_check
      _
    $region11: #{tpu_custom_call.1} parent=1 // pred_check_branch
      %35 = sbr.rel (0) target = $region13
    $region12: #{tpu_custom_call.1} parent=1 // pred_region
      %36 = dma.done [#allocation3], 1024
    $region13: #{tpu_custom_call.1} parent=1 // pred_fallthru
      _
    // Predicated region
    $region14: #{tpu_custom_call.1} parent=1 // pred_check
      _
    $region15: #{tpu_custom_call.1} parent=1 // pred_check_branch
      %38 = sbr.rel (0) target = $region17
    $region16: #{tpu_custom_call.1} parent=1 // pred_region
      %39 = dma.done [#allocation6], 2048
    $region17: #{tpu_custom_call.1} parent=1 // pred_fallthru
      _
    %v40 = vld [vmem:[#allocation5] sm:$0xff]
    %v41 = vld [vmem:[#allocation5 + $0x8] sm:$0xff]
    %v42 = vld [vmem:[#allocation5 + $0x10] sm:$0xff]
    %v43 = vld [vmem:[#allocation5 + $0x18] sm:$0xff]
    %v44 = vld [vmem:[#allocation5 + $0x20] sm:$0xff]
    %v45 = vld [vmem:[#allocation5 + $0x28] sm:$0xff]
    %v46 = vld [vmem:[#allocation5 + $0x30] sm:$0xff]
    %v47 = vld [vmem:[#allocation5 + $0x38] sm:$0xff]
    %v48 = vld [vmem:[#allocation5 + $0x40] sm:$0xff]
    %v49 = vld [vmem:[#allocation5 + $0x48] sm:$0xff]
    %v50 = vld [vmem:[#allocation5 + $0x50] sm:$0xff]
    %v51 = vld [vmem:[#allocation5 + $0x58] sm:$0xff]
    %v52 = vld [vmem:[#allocation5 + $0x60] sm:$0xff]
    %v53 = vld [vmem:[#allocation5 + $0x68] sm:$0xff]
    %v54 = vld [vmem:[#allocation5 + $0x70] sm:$0xff]
    %v55 = vld [vmem:[#allocation5 + $0x78] sm:$0xff]
    %v56 = vld [vmem:[#allocation2] sm:$0x1]
    %v57 = vld [vmem:[#allocation2 + $0x4] sm:$0x1]
    %v58 = vld [vmem:[#allocation2 + $0x8] sm:$0x1]
    %v59 = vld [vmem:[#allocation2 + $0xc] sm:$0x1]
    %v60 = vld [vmem:[#allocation2 + $0x10] sm:$0x1]
    %v61 = vld [vmem:[#allocation2 + $0x14] sm:$0x1]
    %v62 = vld [vmem:[#allocation2 + $0x18] sm:$0x1]
    %v63 = vld [vmem:[#allocation2 + $0x1c] sm:$0x1]
    %v64 = vld [vmem:[#allocation2 + $0x20] sm:$0x1]
    %v65 = vld [vmem:[#allocation2 + $0x24] sm:$0x1]
    %v66 = vld [vmem:[#allocation2 + $0x28] sm:$0x1]
    %v67 = vld [vmem:[#allocation2 + $0x2c] sm:$0x1]
    %v68 = vld [vmem:[#allocation2 + $0x30] sm:$0x1]
    %v69 = vld [vmem:[#allocation2 + $0x34] sm:$0x1]
    %v70 = vld [vmem:[#allocation2 + $0x38] sm:$0x1]
    %v71 = vld [vmem:[#allocation2 + $0x3c] sm:$0x1]
    %v88 = vrot.slane %v57, 7
    %vm89 = vcmask 1041409
    %v90 = vsel %vm89, %v88, %v56
    %v91 = vrot.slane %v58, 6
    %vm92 = vcmask 1042434
    %v93 = vsel %vm92, %v91, %v90
    %v94 = vrot.slane %v59, 5
    %vm95 = vcmask 1043459
    %v96 = vsel %vm95, %v94, %v93
    %v97 = vrot.slane %v60, 4
    %vm98 = vcmask 1044484
    %v99 = vsel %vm98, %v97, %v96
    %v100 = vrot.slane %v61, 3
    %vm101 = vcmask 1045509
    %v102 = vsel %vm101, %v100, %v99
    %v103 = vrot.slane %v62, 2
    %vm104 = vcmask 1046534
    %v105 = vsel %vm104, %v103, %v102
    %v106 = vrot.slane %v63, 1
    %vm107 = vcmask 1047559
    %v108 = vsel %vm107, %v106, %v105
    %v109 = vrot.slane %v65, 7
    %v110 = vsel %vm89, %v109, %v64
    %v111 = vrot.slane %v66, 6
    %v112 = vsel %vm92, %v111, %v110
    %v113 = vrot.slane %v67, 5
    %v114 = vsel %vm95, %v113, %v112
    %v115 = vrot.slane %v68, 4
    %v116 = vsel %vm98, %v115, %v114
    %v117 = vrot.slane %v69, 3
    %v118 = vsel %vm101, %v117, %v116
    %v119 = vrot.slane %v70, 2
    %v120 = vsel %vm104, %v119, %v118
    %v121 = vrot.slane %v71, 1
    %v122 = vsel %vm107, %v121, %v120
    %vm123 = vcmask 523264
    %v124 = vsel %vm123, %v108, 0
    %v126 = vsel %vm123, %v122, 0
    %128 = vmatprep.subr.mxu0 %v41
    %129 = vmatpush1.msra.mxu0 %v40
    %130 = vmatprep.subr.mxu0 %v43
    %131 = vmatpush1.msra.mxu0 %v42
    %132 = vmatprep.subr.mxu0 %v45
    %133 = vmatpush1.msra.mxu0 %v44
    %134 = vmatprep.subr.mxu0 %v47
    %135 = vmatpush1.msra.mxu0 %v46
    %136 = vmatprep.subr.mxu0 %v49
    %137 = vmatpush1.msra.mxu0 %v48
    %138 = vmatprep.subr.mxu0 %v51
    %139 = vmatpush1.msra.mxu0 %v50
    %140 = vmatprep.subr.mxu0 %v53
    %141 = vmatpush1.msra.mxu0 %v52
    %142 = vmatprep.subr.mxu0 %v55
    %143 = vmatpush1.msra.mxu0 %v54
    %144 = vmatprep.subr.mxu0 0.0
    %145 = vmatpush1.msra.mxu0 0.0
    %146 = vmatprep.subr.mxu0 0.0
    %147 = vmatpush1.msra.mxu0 0.0
    %148 = vmatprep.subr.mxu0 0.0
    %149 = vmatpush1.msra.mxu0 0.0
    %150 = vmatprep.subr.mxu0 0.0
    %151 = vmatpush1.msra.mxu0 0.0
    %152 = vmatprep.subr.mxu0 0.0
    %153 = vmatpush1.msra.mxu0 0.0
    %154 = vmatprep.subr.mxu0 0.0
    %155 = vmatpush1.msra.mxu0 0.0
    %156 = vmatprep.subr.mxu0 0.0
    %157 = vmatpush1.msra.mxu0 0.0
    %158 = vmatprep.subr.mxu0 0.0
    %159 = vmatpush1.msra.mxu0 0.0
    %160 = vmatprep.subr.mxu0 0.0
    %161 = vmatpush1.msra.mxu0 0.0
    %162 = vmatprep.subr.mxu0 0.0
    %163 = vmatpush1.msra.mxu0 0.0
    %164 = vmatprep.subr.mxu0 0.0
    %165 = vmatpush1.msra.mxu0 0.0
    %166 = vmatprep.subr.mxu0 0.0
    %167 = vmatpush1.msra.mxu0 0.0
    %168 = vmatprep.subr.mxu0 0.0
    %169 = vmatpush1.msra.mxu0 0.0
    %170 = vmatprep.subr.mxu0 0.0
    %171 = vmatpush1.msra.mxu0 0.0
    %172 = vmatprep.subr.mxu0 0.0
    %173 = vmatpush1.msra.mxu0 0.0
    %174 = vmatprep.subr.mxu0 0.0
    %175 = vmatpush1.msra.mxu0 0.0
    %176 = vmatprep.subr.mxu0 0.0
    %177 = vmatpush1.msra.mxu0 0.0
    %178 = vmatprep.subr.mxu0 0.0
    %179 = vmatpush1.msra.mxu0 0.0
    %180 = vmatprep.subr.mxu0 0.0
    %181 = vmatpush1.msra.mxu0 0.0
    %182 = vmatprep.subr.mxu0 0.0
    %183 = vmatpush1.msra.mxu0 0.0
    %184 = vmatprep.subr.mxu0 0.0
    %185 = vmatpush1.msra.mxu0 0.0
    %186 = vmatprep.subr.mxu0 0.0
    %187 = vmatpush1.msra.mxu0 0.0
    %188 = vmatprep.subr.mxu0 0.0
    %189 = vmatpush1.msra.mxu0 0.0
    %190 = vmatprep.subr.mxu0 0.0
    %191 = vmatpush1.msra.mxu0 0.0
    %192 = vmatprep.mubr.f32.mxu0 0.0
    %193 = vmatmul.mubr.f32.gmra.mrb[0].mxu0 %v124
    %v194 = vpop.f32.mrb[0].mxu0
    %v195 = vadd.f32 0.0, %v194
    %v196 = vpop.f32.mrb[0].mxu0
    %v197 = vadd.f32 0.0, %v196
    %198 = vmatprep.mubr.f32.mxu0 0.0
    %199 = vmatmul.mubr.f32.gmra.mrb[0].mxu0 %v126
    %v200 = vpop.f32.mrb[0].mxu0
    %v201 = vadd.f32 0.0, %v200
    %v202 = vpop.f32.mrb[0].mxu0
    %v203 = vadd.f32 0.0, %v202
    %204 = vdwg.mxu0
    %v209 = vcombine.low %v195, %v197
    %v210 = vcombine.high %v195, %v197
    %v212 = vunpack.c.l.s4 1966171168
    %v213 = vunpack.c.0.s8 %v212
    %v214 = vlaneseq
    %v215 = vshrl.u32 %v214, 7
    %v216 = vsub.s32 %v213, %v215
    %v217 = vrot.slane %v209, %v216
    %v219 = vunpack.c.l.s4 1966171168
    %v220 = vunpack.c.0.s8 %v219
    %v221 = vlaneseq
    %v222 = vshrl.u32 %v221, 7
    %v223 = vsub.s32 %v220, %v222
    %v224 = vrot.slane %v210, %v223
    %v225 = vcombine.high %v217, %v217
    %v226 = vcombine.high %v224, %v224
    %v228 = vunpack.c.l.s4 1966171168
    %v229 = vunpack.c.0.s8 %v228
    %v230 = vlaneseq
    %v231 = vshrl.u32 %v230, 7
    %v232 = vsub.s32 %v229, %v231
    %v233 = vrot.slane %v217, %v232
    %v235 = vunpack.c.l.s4 1966171168
    %v236 = vunpack.c.0.s8 %v235
    %v237 = vlaneseq
    %v238 = vshrl.u32 %v237, 7
    %v239 = vsub.s32 %v236, %v238
    %v240 = vrot.slane %v224, %v239
    %v242 = vunpack.c.l.s4 1966171168
    %v243 = vunpack.c.0.s8 %v242
    %v244 = vlaneseq
    %v245 = vshrl.u32 %v244, 7
    %v246 = vsub.s32 %v243, %v245
    %v247 = vrot.slane %v225, %v246
    %v249 = vunpack.c.l.s4 1966171168
    %v250 = vunpack.c.0.s8 %v249
    %v251 = vlaneseq
    %v252 = vshrl.u32 %v251, 7
    %v253 = vsub.s32 %v250, %v252
    %v254 = vrot.slane %v226, %v253
    %v255 = vcombine.high %v233, %v233
    %v256 = vcombine.high %v240, %v240
    %v257 = vcombine.high %v247, %v247
    %v258 = vcombine.high %v254, %v254
    %v259 = vcombine.low %v201, %v203
    %v260 = vcombine.high %v201, %v203
    %v262 = vunpack.c.l.s4 1966171168
    %v263 = vunpack.c.0.s8 %v262
    %v264 = vlaneseq
    %v265 = vshrl.u32 %v264, 7
    %v266 = vsub.s32 %v263, %v265
    %v267 = vrot.slane %v259, %v266
    %v269 = vunpack.c.l.s4 1966171168
    %v270 = vunpack.c.0.s8 %v269
    %v271 = vlaneseq
    %v272 = vshrl.u32 %v271, 7
    %v273 = vsub.s32 %v270, %v272
    %v274 = vrot.slane %v260, %v273
    %v275 = vcombine.high %v267, %v267
    %v276 = vcombine.high %v274, %v274
    %v278 = vunpack.c.l.s4 1966171168
    %v279 = vunpack.c.0.s8 %v278
    %v280 = vlaneseq
    %v281 = vshrl.u32 %v280, 7
    %v282 = vsub.s32 %v279, %v281
    %v283 = vrot.slane %v267, %v282
    %v285 = vunpack.c.l.s4 1966171168
    %v286 = vunpack.c.0.s8 %v285
    %v287 = vlaneseq
    %v288 = vshrl.u32 %v287, 7
    %v289 = vsub.s32 %v286, %v288
    %v290 = vrot.slane %v274, %v289
    %v292 = vunpack.c.l.s4 1966171168
    %v293 = vunpack.c.0.s8 %v292
    %v294 = vlaneseq
    %v295 = vshrl.u32 %v294, 7
    %v296 = vsub.s32 %v293, %v295
    %v297 = vrot.slane %v275, %v296
    %v299 = vunpack.c.l.s4 1966171168
    %v300 = vunpack.c.0.s8 %v299
    %v301 = vlaneseq
    %v302 = vshrl.u32 %v301, 7
    %v303 = vsub.s32 %v300, %v302
    %v304 = vrot.slane %v276, %v303
    %v305 = vcombine.high %v283, %v283
    %v306 = vcombine.high %v290, %v290
    %v307 = vcombine.high %v297, %v297
    %v308 = vcombine.high %v304, %v304
    %v325 = vlaneseq
    %vm326 = vcmp.ge.s32.totalorder %v325, 0
    %vm327 = vcmp.lt.s32.totalorder %v325, 256
    %vm328 = vmand %vm326, %vm327
    %329 = vst.msk [vmem:[#allocation7] ss:$8 sm:$0x3] %vm328, %v233
    %330 = vst.msk [vmem:[#allocation7] ss:$8 sm:$0x0] %vm328, %v233
    %s331 = scalar_lea.vmem [#allocation7], 16
    %332 = vst.msk [vmem:[%s331] ss:$8 sm:$0x3] %vm328, %v247
    %333 = vst.msk [vmem:[%s331] ss:$8 sm:$0x0] %vm328, %v247
    %s334 = scalar_lea.vmem [#allocation7], 32
    %335 = vst.msk [vmem:[%s334] ss:$8 sm:$0x3] %vm328, %v255
    %336 = vst.msk [vmem:[%s334] ss:$8 sm:$0x0] %vm328, %v255
    %s337 = scalar_lea.vmem [#allocation7], 48
    %338 = vst.msk [vmem:[%s337] ss:$8 sm:$0x3] %vm328, %v257
    %339 = vst.msk [vmem:[%s337] ss:$8 sm:$0x0] %vm328, %v257
    %s340 = scalar_lea.vmem [#allocation7], 64
    %341 = vst.msk [vmem:[%s340] ss:$8 sm:$0x3] %vm328, %v240
    %342 = vst.msk [vmem:[%s340] ss:$8 sm:$0x0] %vm328, %v240
    %s343 = scalar_lea.vmem [#allocation7], 80
    %344 = vst.msk [vmem:[%s343] ss:$8 sm:$0x3] %vm328, %v254
    %345 = vst.msk [vmem:[%s343] ss:$8 sm:$0x0] %vm328, %v254
    %s346 = scalar_lea.vmem [#allocation7], 96
    %347 = vst.msk [vmem:[%s346] ss:$8 sm:$0x3] %vm328, %v256
    %348 = vst.msk [vmem:[%s346] ss:$8 sm:$0x0] %vm328, %v256
    %s349 = scalar_lea.vmem [#allocation7], 112
    %350 = vst.msk [vmem:[%s349] ss:$8 sm:$0x3] %vm328, %v258
    %351 = vst.msk [vmem:[%s349] ss:$8 sm:$0x0] %vm328, %v258
    %s352 = scalar_lea.vmem [#allocation7], 128
    %353 = vst.msk [vmem:[%s352] ss:$8 sm:$0x3] %vm328, %v283
    %354 = vst.msk [vmem:[%s352] ss:$8 sm:$0x0] %vm328, %v283
    %s355 = scalar_lea.vmem [#allocation7], 144
    %356 = vst.msk [vmem:[%s355] ss:$8 sm:$0x3] %vm328, %v297
    %357 = vst.msk [vmem:[%s355] ss:$8 sm:$0x0] %vm328, %v297
    %s358 = scalar_lea.vmem [#allocation7], 160
    %359 = vst.msk [vmem:[%s358] ss:$8 sm:$0x3] %vm328, %v305
    %360 = vst.msk [vmem:[%s358] ss:$8 sm:$0x0] %vm328, %v305
    %s361 = scalar_lea.vmem [#allocation7], 176
    %362 = vst.msk [vmem:[%s361] ss:$8 sm:$0x3] %vm328, %v307
    %363 = vst.msk [vmem:[%s361] ss:$8 sm:$0x0] %vm328, %v307
    %s364 = scalar_lea.vmem [#allocation7], 192
    %365 = vst.msk [vmem:[%s364] ss:$8 sm:$0x3] %vm328, %v290
    %366 = vst.msk [vmem:[%s364] ss:$8 sm:$0x0] %vm328, %v290
    %s367 = scalar_lea.vmem [#allocation7], 208
    %368 = vst.msk [vmem:[%s367] ss:$8 sm:$0x3] %vm328, %v304
    %369 = vst.msk [vmem:[%s367] ss:$8 sm:$0x0] %vm328, %v304
    %s370 = scalar_lea.vmem [#allocation7], 224
    %371 = vst.msk [vmem:[%s370] ss:$8 sm:$0x3] %vm328, %v306
    %372 = vst.msk [vmem:[%s370] ss:$8 sm:$0x0] %vm328, %v306
    %s373 = scalar_lea.vmem [#allocation7], 240
    %374 = vst.msk [vmem:[%s373] ss:$8 sm:$0x3] %vm328, %v308
    %375 = vst.msk [vmem:[%s373] ss:$8 sm:$0x0] %vm328, %v308
    %s376 = scalar_lea.vmem [#allocation7], 1
    %377 = vst.msk [vmem:[%s376] ss:$8 sm:$0x3] %vm328, %v233
    %378 = vst.msk [vmem:[%s376] ss:$8 sm:$0x0] %vm328, %v233
    %s379 = scalar_lea.vmem [#allocation7], 17
    %380 = vst.msk [vmem:[%s379] ss:$8 sm:$0x3] %vm328, %v247
    %381 = vst.msk [vmem:[%s379] ss:$8 sm:$0x0] %vm328, %v247
    %s382 = scalar_lea.vmem [#allocation7], 33
    %383 = vst.msk [vmem:[%s382] ss:$8 sm:$0x3] %vm328, %v255
    %384 = vst.msk [vmem:[%s382] ss:$8 sm:$0x0] %vm328, %v255
    %s385 = scalar_lea.vmem [#allocation7], 49
    %386 = vst.msk [vmem:[%s385] ss:$8 sm:$0x3] %vm328, %v257
    %387 = vst.msk [vmem:[%s385] ss:$8 sm:$0x0] %vm328, %v257
    %s388 = scalar_lea.vmem [#allocation7], 65
    %389 = vst.msk [vmem:[%s388] ss:$8 sm:$0x3] %vm328, %v240
    %390 = vst.msk [vmem:[%s388] ss:$8 sm:$0x0] %vm328, %v240
    %s391 = scalar_lea.vmem [#allocation7], 81
    %392 = vst.msk [vmem:[%s391] ss:$8 sm:$0x3] %vm328, %v254
    %393 = vst.msk [vmem:[%s391] ss:$8 sm:$0x0] %vm328, %v254
    %s394 = scalar_lea.vmem [#allocation7], 97
    %395 = vst.msk [vmem:[%s394] ss:$8 sm:$0x3] %vm328, %v256
    %396 = vst.msk [vmem:[%s394] ss:$8 sm:$0x0] %vm328, %v256
    %s397 = scalar_lea.vmem [#allocation7], 113
    %398 = vst.msk [vmem:[%s397] ss:$8 sm:$0x3] %vm328, %v258
    %399 = vst.msk [vmem:[%s397] ss:$8 sm:$0x0] %vm328, %v258
    %s400 = scalar_lea.vmem [#allocation7], 129
    %401 = vst.msk [vmem:[%s400] ss:$8 sm:$0x3] %vm328, %v283
    %402 = vst.msk [vmem:[%s400] ss:$8 sm:$0x0] %vm328, %v283
    %s403 = scalar_lea.vmem [#allocation7], 145
    %404 = vst.msk [vmem:[%s403] ss:$8 sm:$0x3] %vm328, %v297
    %405 = vst.msk [vmem:[%s403] ss:$8 sm:$0x0] %vm328, %v297
    %s406 = scalar_lea.vmem [#allocation7], 161
    %407 = vst.msk [vmem:[%s406] ss:$8 sm:$0x3] %vm328, %v305
    %408 = vst.msk [vmem:[%s406] ss:$8 sm:$0x0] %vm328, %v305
    %s409 = scalar_lea.vmem [#allocation7], 177
    %410 = vst.msk [vmem:[%s409] ss:$8 sm:$0x3] %vm328, %v307
    %411 = vst.msk [vmem:[%s409] ss:$8 sm:$0x0] %vm328, %v307
    %s412 = scalar_lea.vmem [#allocation7], 193
    %413 = vst.msk [vmem:[%s412] ss:$8 sm:$0x3] %vm328, %v290
    %414 = vst.msk [vmem:[%s412] ss:$8 sm:$0x0] %vm328, %v290
    %s415 = scalar_lea.vmem [#allocation7], 209
    %416 = vst.msk [vmem:[%s415] ss:$8 sm:$0x3] %vm328, %v304
    %417 = vst.msk [vmem:[%s415] ss:$8 sm:$0x0] %vm328, %v304
    %s418 = scalar_lea.vmem [#allocation7], 225
    %419 = vst.msk [vmem:[%s418] ss:$8 sm:$0x3] %vm328, %v306
    %420 = vst.msk [vmem:[%s418] ss:$8 sm:$0x0] %vm328, %v306
    %s421 = scalar_lea.vmem [#allocation7], 241
    %422 = vst.msk [vmem:[%s421] ss:$8 sm:$0x3] %vm328, %v308
    %423 = vst.msk [vmem:[%s421] ss:$8 sm:$0x0] %vm328, %v308
    %v424 = vld [vmem:[#allocation2 + $0x1] sm:$0x1]
    %v425 = vld [vmem:[#allocation2 + $0x5] sm:$0x1]
    %v426 = vld [vmem:[#allocation2 + $0x9] sm:$0x1]
    %v427 = vld [vmem:[#allocation2 + $0xd] sm:$0x1]
    %v428 = vld [vmem:[#allocation2 + $0x11] sm:$0x1]
    %v429 = vld [vmem:[#allocation2 + $0x15] sm:$0x1]
    %v430 = vld [vmem:[#allocation2 + $0x19] sm:$0x1]
    %v431 = vld [vmem:[#allocation2 + $0x1d] sm:$0x1]
    %v432 = vld [vmem:[#allocation2 + $0x21] sm:$0x1]
    %v433 = vld [vmem:[#allocation2 + $0x25] sm:$0x1]
    %v434 = vld [vmem:[#allocation2 + $0x29] sm:$0x1]
    %v435 = vld [vmem:[#allocation2 + $0x2d] sm:$0x1]
    %v436 = vld [vmem:[#allocation2 + $0x31] sm:$0x1]
    %v437 = vld [vmem:[#allocation2 + $0x35] sm:$0x1]
    %v438 = vld [vmem:[#allocation2 + $0x39] sm:$0x1]
    %v439 = vld [vmem:[#allocation2 + $0x3d] sm:$0x1]
    %v456 = vrot.slane %v425, 7
    %v457 = vsel %vm89, %v456, %v424
    %v458 = vrot.slane %v426, 6
    %v459 = vsel %vm92, %v458, %v457
    %v460 = vrot.slane %v427, 5
    %v461 = vsel %vm95, %v460, %v459
    %v462 = vrot.slane %v428, 4
    %v463 = vsel %vm98, %v462, %v461
    %v464 = vrot.slane %v429, 3
    %v465 = vsel %vm101, %v464, %v463
    %v466 = vrot.slane %v430, 2
    %v467 = vsel %vm104, %v466, %v465
    %v468 = vrot.slane %v431, 1
    %v469 = vsel %vm107, %v468, %v467
    %v470 = vrot.slane %v433, 7
    %v471 = vsel %vm89, %v470, %v432
    %v472 = vrot.slane %v434, 6
    %v473 = vsel %vm92, %v472, %v471
    %v474 = vrot.slane %v435, 5
    %v475 = vsel %vm95, %v474, %v473
    %v476 = vrot.slane %v436, 4
    %v477 = vsel %vm98, %v476, %v475
    %v478 = vrot.slane %v437, 3
    %v479 = vsel %vm101, %v478, %v477
    %v480 = vrot.slane %v438, 2
    %v481 = vsel %vm104, %v480, %v479
    %v482 = vrot.slane %v439, 1
    %v483 = vsel %vm107, %v482, %v481
    %v484 = vsel %vm123, %v469, 0
    %v486 = vsel %vm123, %v483, 0
    %488 = vmatprep.subr.mxu0 %v41
    %489 = vmatpush1.msra.mxu0 %v40
    %490 = vmatprep.subr.mxu0 %v43
    %491 = vmatpush1.msra.mxu0 %v42
    %492 = vmatprep.subr.mxu0 %v45
    %493 = vmatpush1.msra.mxu0 %v44
    %494 = vmatprep.subr.mxu0 %v47
    %495 = vmatpush1.msra.mxu0 %v46
    %496 = vmatprep.subr.mxu0 %v49
    %497 = vmatpush1.msra.mxu0 %v48
    %498 = vmatprep.subr.mxu0 %v51
    %499 = vmatpush1.msra.mxu0 %v50
    %500 = vmatprep.subr.mxu0 %v53
    %501 = vmatpush1.msra.mxu0 %v52
    %502 = vmatprep.subr.mxu0 %v55
    %503 = vmatpush1.msra.mxu0 %v54
    %504 = vmatprep.subr.mxu0 0.0
    %505 = vmatpush1.msra.mxu0 0.0
    %506 = vmatprep.subr.mxu0 0.0
    %507 = vmatpush1.msra.mxu0 0.0
    %508 = vmatprep.subr.mxu0 0.0
    %509 = vmatpush1.msra.mxu0 0.0
    %510 = vmatprep.subr.mxu0 0.0
    %511 = vmatpush1.msra.mxu0 0.0
    %512 = vmatprep.subr.mxu0 0.0
    %513 = vmatpush1.msra.mxu0 0.0
    %514 = vmatprep.subr.mxu0 0.0
    %515 = vmatpush1.msra.mxu0 0.0
    %516 = vmatprep.subr.mxu0 0.0
    %517 = vmatpush1.msra.mxu0 0.0
    %518 = vmatprep.subr.mxu0 0.0
    %519 = vmatpush1.msra.mxu0 0.0
    %520 = vmatprep.subr.mxu0 0.0
    %521 = vmatpush1.msra.mxu0 0.0
    %522 = vmatprep.subr.mxu0 0.0
    %523 = vmatpush1.msra.mxu0 0.0
    %524 = vmatprep.subr.mxu0 0.0
    %525 = vmatpush1.msra.mxu0 0.0
    %526 = vmatprep.subr.mxu0 0.0
    %527 = vmatpush1.msra.mxu0 0.0
    %528 = vmatprep.subr.mxu0 0.0
    %529 = vmatpush1.msra.mxu0 0.0
    %530 = vmatprep.subr.mxu0 0.0
    %531 = vmatpush1.msra.mxu0 0.0
    %532 = vmatprep.subr.mxu0 0.0
    %533 = vmatpush1.msra.mxu0 0.0
    %534 = vmatprep.subr.mxu0 0.0
    %535 = vmatpush1.msra.mxu0 0.0
    %536 = vmatprep.subr.mxu0 0.0
    %537 = vmatpush1.msra.mxu0 0.0
    %538 = vmatprep.subr.mxu0 0.0
    %539 = vmatpush1.msra.mxu0 0.0
    %540 = vmatprep.subr.mxu0 0.0
    %541 = vmatpush1.msra.mxu0 0.0
    %542 = vmatprep.subr.mxu0 0.0
    %543 = vmatpush1.msra.mxu0 0.0
    %544 = vmatprep.subr.mxu0 0.0
    %545 = vmatpush1.msra.mxu0 0.0
    %546 = vmatprep.subr.mxu0 0.0
    %547 = vmatpush1.msra.mxu0 0.0
    %548 = vmatprep.subr.mxu0 0.0
    %549 = vmatpush1.msra.mxu0 0.0
    %550 = vmatprep.subr.mxu0 0.0
    %551 = vmatpush1.msra.mxu0 0.0
    %552 = vmatprep.mubr.f32.mxu0 0.0
    %553 = vmatmul.mubr.f32.gmra.mrb[0].mxu0 %v484
    %v554 = vpop.f32.mrb[0].mxu0
    %v555 = vadd.f32 0.0, %v554
    %v556 = vpop.f32.mrb[0].mxu0
    %v557 = vadd.f32 0.0, %v556
    %558 = vmatprep.mubr.f32.mxu0 0.0
    %559 = vmatmul.mubr.f32.gmra.mrb[0].mxu0 %v486
    %v560 = vpop.f32.mrb[0].mxu0
    %v561 = vadd.f32 0.0, %v560
    %v562 = vpop.f32.mrb[0].mxu0
    %v563 = vadd.f32 0.0, %v562
    %564 = vdwg.mxu0
    %v569 = vcombine.low %v555, %v557
    %v570 = vcombine.high %v555, %v557
    %v572 = vunpack.c.l.s4 1966171168
    %v573 = vunpack.c.0.s8 %v572
    %v574 = vlaneseq
    %v575 = vshrl.u32 %v574, 7
    %v576 = vsub.s32 %v573, %v575
    %v577 = vrot.slane %v569, %v576
    %v579 = vunpack.c.l.s4 1966171168
    %v580 = vunpack.c.0.s8 %v579
    %v581 = vlaneseq
    %v582 = vshrl.u32 %v581, 7
    %v583 = vsub.s32 %v580, %v582
    %v584 = vrot.slane %v570, %v583
    %v585 = vcombine.high %v577, %v577
    %v586 = vcombine.high %v584, %v584
    %v588 = vunpack.c.l.s4 1966171168
    %v589 = vunpack.c.0.s8 %v588
    %v590 = vlaneseq
    %v591 = vshrl.u32 %v590, 7
    %v592 = vsub.s32 %v589, %v591
    %v593 = vrot.slane %v577, %v592
    %v595 = vunpack.c.l.s4 1966171168
    %v596 = vunpack.c.0.s8 %v595
    %v597 = vlaneseq
    %v598 = vshrl.u32 %v597, 7
    %v599 = vsub.s32 %v596, %v598
    %v600 = vrot.slane %v584, %v599
    %v602 = vunpack.c.l.s4 1966171168
    %v603 = vunpack.c.0.s8 %v602
    %v604 = vlaneseq
    %v605 = vshrl.u32 %v604, 7
    %v606 = vsub.s32 %v603, %v605
    %v607 = vrot.slane %v585, %v606
    %v609 = vunpack.c.l.s4 1966171168
    %v610 = vunpack.c.0.s8 %v609
    %v611 = vlaneseq
    %v612 = vshrl.u32 %v611, 7
    %v613 = vsub.s32 %v610, %v612
    %v614 = vrot.slane %v586, %v613
    %v615 = vcombine.high %v593, %v593
    %v616 = vcombine.high %v600, %v600
    %v617 = vcombine.high %v607, %v607
    %v618 = vcombine.high %v614, %v614
    %v619 = vcombine.low %v561, %v563
    %v620 = vcombine.high %v561, %v563
    %v622 = vunpack.c.l.s4 1966171168
    %v623 = vunpack.c.0.s8 %v622
    %v624 = vlaneseq
    %v625 = vshrl.u32 %v624, 7
    %v626 = vsub.s32 %v623, %v625
    %v627 = vrot.slane %v619, %v626
    %v629 = vunpack.c.l.s4 1966171168
    %v630 = vunpack.c.0.s8 %v629
    %v631 = vlaneseq
    %v632 = vshrl.u32 %v631, 7
    %v633 = vsub.s32 %v630, %v632
    %v634 = vrot.slane %v620, %v633
    %v635 = vcombine.high %v627, %v627
    %v636 = vcombine.high %v634, %v634
    %v638 = vunpack.c.l.s4 1966171168
    %v639 = vunpack.c.0.s8 %v638
    %v640 = vlaneseq
    %v641 = vshrl.u32 %v640, 7
    %v642 = vsub.s32 %v639, %v641
    %v643 = vrot.slane %v627, %v642
    %v645 = vunpack.c.l.s4 1966171168
    %v646 = vunpack.c.0.s8 %v645
    %v647 = vlaneseq
    %v648 = vshrl.u32 %v647, 7
    %v649 = vsub.s32 %v646, %v648
    %v650 = vrot.slane %v634, %v649
    %v652 = vunpack.c.l.s4 1966171168
    %v653 = vunpack.c.0.s8 %v652
    %v654 = vlaneseq
    %v655 = vshrl.u32 %v654, 7
    %v656 = vsub.s32 %v653, %v655
    %v657 = vrot.slane %v635, %v656
    %v659 = vunpack.c.l.s4 1966171168
    %v660 = vunpack.c.0.s8 %v659
    %v661 = vlaneseq
    %v662 = vshrl.u32 %v661, 7
    %v663 = vsub.s32 %v660, %v662
    %v664 = vrot.slane %v636, %v663
    %v665 = vcombine.high %v643, %v643
    %v666 = vcombine.high %v650, %v650
    %v667 = vcombine.high %v657, %v657
    %v668 = vcombine.high %v664, %v664
    %s685 = scalar_lea.vmem [#allocation7], 2
    %686 = vst.msk [vmem:[%s685] ss:$8 sm:$0x3] %vm328, %v593
    %687 = vst.msk [vmem:[%s685] ss:$8 sm:$0x0] %vm328, %v593
    %s688 = scalar_lea.vmem [#allocation7], 18
    %689 = vst.msk [vmem:[%s688] ss:$8 sm:$0x3] %vm328, %v607
    %690 = vst.msk [vmem:[%s688] ss:$8 sm:$0x0] %vm328, %v607
    %s691 = scalar_lea.vmem [#allocation7], 34
    %692 = vst.msk [vmem:[%s691] ss:$8 sm:$0x3] %vm328, %v615
    %693 = vst.msk [vmem:[%s691] ss:$8 sm:$0x0] %vm328, %v615
    %s694 = scalar_lea.vmem [#allocation7], 50
    %695 = vst.msk [vmem:[%s694] ss:$8 sm:$0x3] %vm328, %v617
    %696 = vst.msk [vmem:[%s694] ss:$8 sm:$0x0] %vm328, %v617
    %s697 = scalar_lea.vmem [#allocation7], 66
    %698 = vst.msk [vmem:[%s697] ss:$8 sm:$0x3] %vm328, %v600
    %699 = vst.msk [vmem:[%s697] ss:$8 sm:$0x0] %vm328, %v600
    %s700 = scalar_lea.vmem [#allocation7], 82
    %701 = vst.msk [vmem:[%s700] ss:$8 sm:$0x3] %vm328, %v614
    %702 = vst.msk [vmem:[%s700] ss:$8 sm:$0x0] %vm328, %v614
    %s703 = scalar_lea.vmem [#allocation7], 98
    %704 = vst.msk [vmem:[%s703] ss:$8 sm:$0x3] %vm328, %v616
    %705 = vst.msk [vmem:[%s703] ss:$8 sm:$0x0] %vm328, %v616
    %s706 = scalar_lea.vmem [#allocation7], 114
    %707 = vst.msk [vmem:[%s706] ss:$8 sm:$0x3] %vm328, %v618
    %708 = vst.msk [vmem:[%s706] ss:$8 sm:$0x0] %vm328, %v618
    %s709 = scalar_lea.vmem [#allocation7], 130
    %710 = vst.msk [vmem:[%s709] ss:$8 sm:$0x3] %vm328, %v643
    %711 = vst.msk [vmem:[%s709] ss:$8 sm:$0x0] %vm328, %v643
    %s712 = scalar_lea.vmem [#allocation7], 146
    %713 = vst.msk [vmem:[%s712] ss:$8 sm:$0x3] %vm328, %v657
    %714 = vst.msk [vmem:[%s712] ss:$8 sm:$0x0] %vm328, %v657
    %s715 = scalar_lea.vmem [#allocation7], 162
    %716 = vst.msk [vmem:[%s715] ss:$8 sm:$0x3] %vm328, %v665
    %717 = vst.msk [vmem:[%s715] ss:$8 sm:$0x0] %vm328, %v665
    %s718 = scalar_lea.vmem [#allocation7], 178
    %719 = vst.msk [vmem:[%s718] ss:$8 sm:$0x3] %vm328, %v667
    %720 = vst.msk [vmem:[%s718] ss:$8 sm:$0x0] %vm328, %v667
    %s721 = scalar_lea.vmem [#allocation7], 194
    %722 = vst.msk [vmem:[%s721] ss:$8 sm:$0x3] %vm328, %v650
    %723 = vst.msk [vmem:[%s721] ss:$8 sm:$0x0] %vm328, %v650
    %s724 = scalar_lea.vmem [#allocation7], 210
    %725 = vst.msk [vmem:[%s724] ss:$8 sm:$0x3] %vm328, %v664
    %726 = vst.msk [vmem:[%s724] ss:$8 sm:$0x0] %vm328, %v664
    %s727 = scalar_lea.vmem [#allocation7], 226
    %728 = vst.msk [vmem:[%s727] ss:$8 sm:$0x3] %vm328, %v666
    %729 = vst.msk [vmem:[%s727] ss:$8 sm:$0x0] %vm328, %v666
    %s730 = scalar_lea.vmem [#allocation7], 242
    %731 = vst.msk [vmem:[%s730] ss:$8 sm:$0x3] %vm328, %v668
    %732 = vst.msk [vmem:[%s730] ss:$8 sm:$0x0] %vm328, %v668
    %s733 = scalar_lea.vmem [#allocation7], 3
    %734 = vst.msk [vmem:[%s733] ss:$8 sm:$0x3] %vm328, %v593
    %735 = vst.msk [vmem:[%s733] ss:$8 sm:$0x0] %vm328, %v593
    %s736 = scalar_lea.vmem [#allocation7], 19
    %737 = vst.msk [vmem:[%s736] ss:$8 sm:$0x3] %vm328, %v607
    %738 = vst.msk [vmem:[%s736] ss:$8 sm:$0x0] %vm328, %v607
    %s739 = scalar_lea.vmem [#allocation7], 35
    %740 = vst.msk [vmem:[%s739] ss:$8 sm:$0x3] %vm328, %v615
    %741 = vst.msk [vmem:[%s739] ss:$8 sm:$0x0] %vm328, %v615
    %s742 = scalar_lea.vmem [#allocation7], 51
    %743 = vst.msk [vmem:[%s742] ss:$8 sm:$0x3] %vm328, %v617
    %744 = vst.msk [vmem:[%s742] ss:$8 sm:$0x0] %vm328, %v617
    %s745 = scalar_lea.vmem [#allocation7], 67
    %746 = vst.msk [vmem:[%s745] ss:$8 sm:$0x3] %vm328, %v600
    %747 = vst.msk [vmem:[%s745] ss:$8 sm:$0x0] %vm328, %v600
    %s748 = scalar_lea.vmem [#allocation7], 83
    %749 = vst.msk [vmem:[%s748] ss:$8 sm:$0x3] %vm328, %v614
    %750 = vst.msk [vmem:[%s748] ss:$8 sm:$0x0] %vm328, %v614
    %s751 = scalar_lea.vmem [#allocation7], 99
    %752 = vst.msk [vmem:[%s751] ss:$8 sm:$0x3] %vm328, %v616
    %753 = vst.msk [vmem:[%s751] ss:$8 sm:$0x0] %vm328, %v616
    %s754 = scalar_lea.vmem [#allocation7], 115
    %755 = vst.msk [vmem:[%s754] ss:$8 sm:$0x3] %vm328, %v618
    %756 = vst.msk [vmem:[%s754] ss:$8 sm:$0x0] %vm328, %v618
    %s757 = scalar_lea.vmem [#allocation7], 131
    %758 = vst.msk [vmem:[%s757] ss:$8 sm:$0x3] %vm328, %v643
    %759 = vst.msk [vmem:[%s757] ss:$8 sm:$0x0] %vm328, %v643
    %s760 = scalar_lea.vmem [#allocation7], 147
    %761 = vst.msk [vmem:[%s760] ss:$8 sm:$0x3] %vm328, %v657
    %762 = vst.msk [vmem:[%s760] ss:$8 sm:$0x0] %vm328, %v657
    %s763 = scalar_lea.vmem [#allocation7], 163
    %764 = vst.msk [vmem:[%s763] ss:$8 sm:$0x3] %vm328, %v665
    %765 = vst.msk [vmem:[%s763] ss:$8 sm:$0x0] %vm328, %v665
    %s766 = scalar_lea.vmem [#allocation7], 179
    %767 = vst.msk [vmem:[%s766] ss:$8 sm:$0x3] %vm328, %v667
    %768 = vst.msk [vmem:[%s766] ss:$8 sm:$0x0] %vm328, %v667
    %s769 = scalar_lea.vmem [#allocation7], 195
    %770 = vst.msk [vmem:[%s769] ss:$8 sm:$0x3] %vm328, %v650
    %771 = vst.msk [vmem:[%s769] ss:$8 sm:$0x0] %vm328, %v650
    %s772 = scalar_lea.vmem [#allocation7], 211
    %773 = vst.msk [vmem:[%s772] ss:$8 sm:$0x3] %vm328, %v664
    %774 = vst.msk [vmem:[%s772] ss:$8 sm:$0x0] %vm328, %v664
    %s775 = scalar_lea.vmem [#allocation7], 227
    %776 = vst.msk [vmem:[%s775] ss:$8 sm:$0x3] %vm328, %v666
    %777 = vst.msk [vmem:[%s775] ss:$8 sm:$0x0] %vm328, %v666
    %s778 = scalar_lea.vmem [#allocation7], 243
    %779 = vst.msk [vmem:[%s778] ss:$8 sm:$0x3] %vm328, %v668
    %780 = vst.msk [vmem:[%s778] ss:$8 sm:$0x0] %vm328, %v668
    %v781 = vld [vmem:[#allocation2 + $0x2] sm:$0x1]
    %v782 = vld [vmem:[#allocation2 + $0x6] sm:$0x1]
    %v783 = vld [vmem:[#allocation2 + $0xa] sm:$0x1]
    %v784 = vld [vmem:[#allocation2 + $0xe] sm:$0x1]
    %v785 = vld [vmem:[#allocation2 + $0x12] sm:$0x1]
    %v786 = vld [vmem:[#allocation2 + $0x16] sm:$0x1]
    %v787 = vld [vmem:[#allocation2 + $0x1a] sm:$0x1]
    %v788 = vld [vmem:[#allocation2 + $0x1e] sm:$0x1]
    %v789 = vld [vmem:[#allocation2 + $0x22] sm:$0x1]
    %v790 = vld [vmem:[#allocation2 + $0x26] sm:$0x1]
    %v791 = vld [vmem:[#allocation2 + $0x2a] sm:$0x1]
    %v792 = vld [vmem:[#allocation2 + $0x2e] sm:$0x1]
    %v793 = vld [vmem:[#allocation2 + $0x32] sm:$0x1]
    %v794 = vld [vmem:[#allocation2 + $0x36] sm:$0x1]
    %v795 = vld [vmem:[#allocation2 + $0x3a] sm:$0x1]
    %v796 = vld [vmem:[#allocation2 + $0x3e] sm:$0x1]
    %v813 = vrot.slane %v782, 7
    %v814 = vsel %vm89, %v813, %v781
    %v815 = vrot.slane %v783, 6
    %v816 = vsel %vm92, %v815, %v814
    %v817 = vrot.slane %v784, 5
    %v818 = vsel %vm95, %v817, %v816
    %v819 = vrot.slane %v785, 4
    %v820 = vsel %vm98, %v819, %v818
    %v821 = vrot.slane %v786, 3
    %v822 = vsel %vm101, %v821, %v820
    %v823 = vrot.slane %v787, 2
    %v824 = vsel %vm104, %v823, %v822
    %v825 = vrot.slane %v788, 1
    %v826 = vsel %vm107, %v825, %v824
    %v827 = vrot.slane %v790, 7
    %v828 = vsel %vm89, %v827, %v789
    %v829 = vrot.slane %v791, 6
    %v830 = vsel %vm92, %v829, %v828
    %v831 = vrot.slane %v792, 5
    %v832 = vsel %vm95, %v831, %v830
    %v833 = vrot.slane %v793, 4
    %v834 = vsel %vm98, %v833, %v832
    %v835 = vrot.slane %v794, 3
    %v836 = vsel %vm101, %v835, %v834
    %v837 = vrot.slane %v795, 2
    %v838 = vsel %vm104, %v837, %v836
    %v839 = vrot.slane %v796, 1
    %v840 = vsel %vm107, %v839, %v838
    %v841 = vsel %vm123, %v826, 0
    %v843 = vsel %vm123, %v840, 0
    %845 = vmatprep.subr.mxu0 %v41
    %846 = vmatpush1.msra.mxu0 %v40
    %847 = vmatprep.subr.mxu0 %v43
    %848 = vmatpush1.msra.mxu0 %v42
    %849 = vmatprep.subr.mxu0 %v45
    %850 = vmatpush1.msra.mxu0 %v44
    %851 = vmatprep.subr.mxu0 %v47
    %852 = vmatpush1.msra.mxu0 %v46
    %853 = vmatprep.subr.mxu0 %v49
    %854 = vmatpush1.msra.mxu0 %v48
    %855 = vmatprep.subr.mxu0 %v51
    %856 = vmatpush1.msra.mxu0 %v50
    %857 = vmatprep.subr.mxu0 %v53
    %858 = vmatpush1.msra.mxu0 %v52
    %859 = vmatprep.subr.mxu0 %v55
    %860 = vmatpush1.msra.mxu0 %v54
    %861 = vmatprep.subr.mxu0 0.0
    %862 = vmatpush1.msra.mxu0 0.0
    %863 = vmatprep.subr.mxu0 0.0
    %864 = vmatpush1.msra.mxu0 0.0
    %865 = vmatprep.subr.mxu0 0.0
    %866 = vmatpush1.msra.mxu0 0.0
    %867 = vmatprep.subr.mxu0 0.0
    %868 = vmatpush1.msra.mxu0 0.0
    %869 = vmatprep.subr.mxu0 0.0
    %870 = vmatpush1.msra.mxu0 0.0
    %871 = vmatprep.subr.mxu0 0.0
    %872 = vmatpush1.msra.mxu0 0.0
    %873 = vmatprep.subr.mxu0 0.0
    %874 = vmatpush1.msra.mxu0 0.0
    %875 = vmatprep.subr.mxu0 0.0
    %876 = vmatpush1.msra.mxu0 0.0
    %877 = vmatprep.subr.mxu0 0.0
    %878 = vmatpush1.msra.mxu0 0.0
    %879 = vmatprep.subr.mxu0 0.0
    %880 = vmatpush1.msra.mxu0 0.0
    %881 = vmatprep.subr.mxu0 0.0
    %882 = vmatpush1.msra.mxu0 0.0
    %883 = vmatprep.subr.mxu0 0.0
    %884 = vmatpush1.msra.mxu0 0.0
    %885 = vmatprep.subr.mxu0 0.0
    %886 = vmatpush1.msra.mxu0 0.0
    %887 = vmatprep.subr.mxu0 0.0
    %888 = vmatpush1.msra.mxu0 0.0
    %889 = vmatprep.subr.mxu0 0.0
    %890 = vmatpush1.msra.mxu0 0.0
    %891 = vmatprep.subr.mxu0 0.0
    %892 = vmatpush1.msra.mxu0 0.0
    %893 = vmatprep.subr.mxu0 0.0
    %894 = vmatpush1.msra.mxu0 0.0
    %895 = vmatprep.subr.mxu0 0.0
    %896 = vmatpush1.msra.mxu0 0.0
    %897 = vmatprep.subr.mxu0 0.0
    %898 = vmatpush1.msra.mxu0 0.0
    %899 = vmatprep.subr.mxu0 0.0
    %900 = vmatpush1.msra.mxu0 0.0
    %901 = vmatprep.subr.mxu0 0.0
    %902 = vmatpush1.msra.mxu0 0.0
    %903 = vmatprep.subr.mxu0 0.0
    %904 = vmatpush1.msra.mxu0 0.0
    %905 = vmatprep.subr.mxu0 0.0
    %906 = vmatpush1.msra.mxu0 0.0
    %907 = vmatprep.subr.mxu0 0.0
    %908 = vmatpush1.msra.mxu0 0.0
    %909 = vmatprep.mubr.f32.mxu0 0.0
    %910 = vmatmul.mubr.f32.gmra.mrb[0].mxu0 %v841
    %v911 = vpop.f32.mrb[0].mxu0
    %v912 = vadd.f32 0.0, %v911
    %v913 = vpop.f32.mrb[0].mxu0
    %v914 = vadd.f32 0.0, %v913
    %915 = vmatprep.mubr.f32.mxu0 0.0
    %916 = vmatmul.mubr.f32.gmra.mrb[0].mxu0 %v843
    %v917 = vpop.f32.mrb[0].mxu0
    %v918 = vadd.f32 0.0, %v917
    %v919 = vpop.f32.mrb[0].mxu0
    %v920 = vadd.f32 0.0, %v919
    %921 = vdwg.mxu0
    %v926 = vcombine.low %v912, %v914
    %v927 = vcombine.high %v912, %v914
    %v929 = vunpack.c.l.s4 1966171168
    %v930 = vunpack.c.0.s8 %v929
    %v931 = vlaneseq
    %v932 = vshrl.u32 %v931, 7
    %v933 = vsub.s32 %v930, %v932
    %v934 = vrot.slane %v926, %v933
    %v936 = vunpack.c.l.s4 1966171168
    %v937 = vunpack.c.0.s8 %v936
    %v938 = vlaneseq
    %v939 = vshrl.u32 %v938, 7
    %v940 = vsub.s32 %v937, %v939
    %v941 = vrot.slane %v927, %v940
    %v942 = vcombine.high %v934, %v934
    %v943 = vcombine.high %v941, %v941
    %v945 = vunpack.c.l.s4 1966171168
    %v946 = vunpack.c.0.s8 %v945
    %v947 = vlaneseq
    %v948 = vshrl.u32 %v947, 7
    %v949 = vsub.s32 %v946, %v948
    %v950 = vrot.slane %v934, %v949
    %v952 = vunpack.c.l.s4 1966171168
    %v953 = vunpack.c.0.s8 %v952
    %v954 = vlaneseq
    %v955 = vshrl.u32 %v954, 7
    %v956 = vsub.s32 %v953, %v955
    %v957 = vrot.slane %v941, %v956
    %v959 = vunpack.c.l.s4 1966171168
    %v960 = vunpack.c.0.s8 %v959
    %v961 = vlaneseq
    %v962 = vshrl.u32 %v961, 7
    %v963 = vsub.s32 %v960, %v962
    %v964 = vrot.slane %v942, %v963
    %v966 = vunpack.c.l.s4 1966171168
    %v967 = vunpack.c.0.s8 %v966
    %v968 = vlaneseq
    %v969 = vshrl.u32 %v968, 7
    %v970 = vsub.s32 %v967, %v969
    %v971 = vrot.slane %v943, %v970
    %v972 = vcombine.high %v950, %v950
    %v973 = vcombine.high %v957, %v957
    %v974 = vcombine.high %v964, %v964
    %v975 = vcombine.high %v971, %v971
    %v976 = vcombine.low %v918, %v920
    %v977 = vcombine.high %v918, %v920
    %v979 = vunpack.c.l.s4 1966171168
    %v980 = vunpack.c.0.s8 %v979
    %v981 = vlaneseq
    %v982 = vshrl.u32 %v981, 7
    %v983 = vsub.s32 %v980, %v982
    %v984 = vrot.slane %v976, %v983
    %v986 = vunpack.c.l.s4 1966171168
    %v987 = vunpack.c.0.s8 %v986
    %v988 = vlaneseq
    %v989 = vshrl.u32 %v988, 7
    %v990 = vsub.s32 %v987, %v989
    %v991 = vrot.slane %v977, %v990
    %v992 = vcombine.high %v984, %v984
    %v993 = vcombine.high %v991, %v991
    %v995 = vunpack.c.l.s4 1966171168
    %v996 = vunpack.c.0.s8 %v995
    %v997 = vlaneseq
    %v998 = vshrl.u32 %v997, 7
    %v999 = vsub.s32 %v996, %v998
    %v1000 = vrot.slane %v984, %v999
    %v1002 = vunpack.c.l.s4 1966171168
    %v1003 = vunpack.c.0.s8 %v1002
    %v1004 = vlaneseq
    %v1005 = vshrl.u32 %v1004, 7
    %v1006 = vsub.s32 %v1003, %v1005
    %v1007 = vrot.slane %v991, %v1006
    %v1009 = vunpack.c.l.s4 1966171168
    %v1010 = vunpack.c.0.s8 %v1009
    %v1011 = vlaneseq
    %v1012 = vshrl.u32 %v1011, 7
    %v1013 = vsub.s32 %v1010, %v1012
    %v1014 = vrot.slane %v992, %v1013
    %v1016 = vunpack.c.l.s4 1966171168
    %v1017 = vunpack.c.0.s8 %v1016
    %v1018 = vlaneseq
    %v1019 = vshrl.u32 %v1018, 7
    %v1020 = vsub.s32 %v1017, %v1019
    %v1021 = vrot.slane %v993, %v1020
    %v1022 = vcombine.high %v1000, %v1000
    %v1023 = vcombine.high %v1007, %v1007
    %v1024 = vcombine.high %v1014, %v1014
    %v1025 = vcombine.high %v1021, %v1021
    %s1042 = scalar_lea.vmem [#allocation7], 4
    %1043 = vst.msk [vmem:[%s1042] ss:$8 sm:$0x3] %vm328, %v950
    %1044 = vst.msk [vmem:[%s1042] ss:$8 sm:$0x0] %vm328, %v950
    %s1045 = scalar_lea.vmem [#allocation7], 20
    %1046 = vst.msk [vmem:[%s1045] ss:$8 sm:$0x3] %vm328, %v964
    %1047 = vst.msk [vmem:[%s1045] ss:$8 sm:$0x0] %vm328, %v964
    %s1048 = scalar_lea.vmem [#allocation7], 36
    %1049 = vst.msk [vmem:[%s1048] ss:$8 sm:$0x3] %vm328, %v972
    %1050 = vst.msk [vmem:[%s1048] ss:$8 sm:$0x0] %vm328, %v972
    %s1051 = scalar_lea.vmem [#allocation7], 52
    %1052 = vst.msk [vmem:[%s1051] ss:$8 sm:$0x3] %vm328, %v974
    %1053 = vst.msk [vmem:[%s1051] ss:$8 sm:$0x0] %vm328, %v974
    %s1054 = scalar_lea.vmem [#allocation7], 68
    %1055 = vst.msk [vmem:[%s1054] ss:$8 sm:$0x3] %vm328, %v957
    %1056 = vst.msk [vmem:[%s1054] ss:$8 sm:$0x0] %vm328, %v957
    %s1057 = scalar_lea.vmem [#allocation7], 84
    %1058 = vst.msk [vmem:[%s1057] ss:$8 sm:$0x3] %vm328, %v971
    %1059 = vst.msk [vmem:[%s1057] ss:$8 sm:$0x0] %vm328, %v971
    %s1060 = scalar_lea.vmem [#allocation7], 100
    %1061 = vst.msk [vmem:[%s1060] ss:$8 sm:$0x3] %vm328, %v973
    %1062 = vst.msk [vmem:[%s1060] ss:$8 sm:$0x0] %vm328, %v973
    %s1063 = scalar_lea.vmem [#allocation7], 116
    %1064 = vst.msk [vmem:[%s1063] ss:$8 sm:$0x3] %vm328, %v975
    %1065 = vst.msk [vmem:[%s1063] ss:$8 sm:$0x0] %vm328, %v975
    %s1066 = scalar_lea.vmem [#allocation7], 132
    %1067 = vst.msk [vmem:[%s1066] ss:$8 sm:$0x3] %vm328, %v1000
    %1068 = vst.msk [vmem:[%s1066] ss:$8 sm:$0x0] %vm328, %v1000
    %s1069 = scalar_lea.vmem [#allocation7], 148
    %1070 = vst.msk [vmem:[%s1069] ss:$8 sm:$0x3] %vm328, %v1014
    %1071 = vst.msk [vmem:[%s1069] ss:$8 sm:$0x0] %vm328, %v1014
    %s1072 = scalar_lea.vmem [#allocation7], 164
    %1073 = vst.msk [vmem:[%s1072] ss:$8 sm:$0x3] %vm328, %v1022
    %1074 = vst.msk [vmem:[%s1072] ss:$8 sm:$0x0] %vm328, %v1022
    %s1075 = scalar_lea.vmem [#allocation7], 180
    %1076 = vst.msk [vmem:[%s1075] ss:$8 sm:$0x3] %vm328, %v1024
    %1077 = vst.msk [vmem:[%s1075] ss:$8 sm:$0x0] %vm328, %v1024
    %s1078 = scalar_lea.vmem [#allocation7], 196
    %1079 = vst.msk [vmem:[%s1078] ss:$8 sm:$0x3] %vm328, %v1007
    %1080 = vst.msk [vmem:[%s1078] ss:$8 sm:$0x0] %vm328, %v1007
    %s1081 = scalar_lea.vmem [#allocation7], 212
    %1082 = vst.msk [vmem:[%s1081] ss:$8 sm:$0x3] %vm328, %v1021
    %1083 = vst.msk [vmem:[%s1081] ss:$8 sm:$0x0] %vm328, %v1021
    %s1084 = scalar_lea.vmem [#allocation7], 228
    %1085 = vst.msk [vmem:[%s1084] ss:$8 sm:$0x3] %vm328, %v1023
    %1086 = vst.msk [vmem:[%s1084] ss:$8 sm:$0x0] %vm328, %v1023
    %s1087 = scalar_lea.vmem [#allocation7], 244
    %1088 = vst.msk [vmem:[%s1087] ss:$8 sm:$0x3] %vm328, %v1025
    %1089 = vst.msk [vmem:[%s1087] ss:$8 sm:$0x0] %vm328, %v1025
    %s1090 = scalar_lea.vmem [#allocation7], 5
    %1091 = vst.msk [vmem:[%s1090] ss:$8 sm:$0x3] %vm328, %v950
    %1092 = vst.msk [vmem:[%s1090] ss:$8 sm:$0x0] %vm328, %v950
    %s1093 = scalar_lea.vmem [#allocation7], 21
    %1094 = vst.msk [vmem:[%s1093] ss:$8 sm:$0x3] %vm328, %v964
    %1095 = vst.msk [vmem:[%s1093] ss:$8 sm:$0x0] %vm328, %v964
    %s1096 = scalar_lea.vmem [#allocation7], 37
    %1097 = vst.msk [vmem:[%s1096] ss:$8 sm:$0x3] %vm328, %v972
    %1098 = vst.msk [vmem:[%s1096] ss:$8 sm:$0x0] %vm328, %v972
    %s1099 = scalar_lea.vmem [#allocation7], 53
    %1100 = vst.msk [vmem:[%s1099] ss:$8 sm:$0x3] %vm328, %v974
    %1101 = vst.msk [vmem:[%s1099] ss:$8 sm:$0x0] %vm328, %v974
    %s1102 = scalar_lea.vmem [#allocation7], 69
    %1103 = vst.msk [vmem:[%s1102] ss:$8 sm:$0x3] %vm328, %v957
    %1104 = vst.msk [vmem:[%s1102] ss:$8 sm:$0x0] %vm328, %v957
    %s1105 = scalar_lea.vmem [#allocation7], 85
    %1106 = vst.msk [vmem:[%s1105] ss:$8 sm:$0x3] %vm328, %v971
    %1107 = vst.msk [vmem:[%s1105] ss:$8 sm:$0x0] %vm328, %v971
    %s1108 = scalar_lea.vmem [#allocation7], 101
    %1109 = vst.msk [vmem:[%s1108] ss:$8 sm:$0x3] %vm328, %v973
    %1110 = vst.msk [vmem:[%s1108] ss:$8 sm:$0x0] %vm328, %v973
    %s1111 = scalar_lea.vmem [#allocation7], 117
    %1112 = vst.msk [vmem:[%s1111] ss:$8 sm:$0x3] %vm328, %v975
    %1113 = vst.msk [vmem:[%s1111] ss:$8 sm:$0x0] %vm328, %v975
    %s1114 = scalar_lea.vmem [#allocation7], 133
    %1115 = vst.msk [vmem:[%s1114] ss:$8 sm:$0x3] %vm328, %v1000
    %1116 = vst.msk [vmem:[%s1114] ss:$8 sm:$0x0] %vm328, %v1000
    %s1117 = scalar_lea.vmem [#allocation7], 149
    %1118 = vst.msk [vmem:[%s1117] ss:$8 sm:$0x3] %vm328, %v1014
    %1119 = vst.msk [vmem:[%s1117] ss:$8 sm:$0x0] %vm328, %v1014
    %s1120 = scalar_lea.vmem [#allocation7], 165
    %1121 = vst.msk [vmem:[%s1120] ss:$8 sm:$0x3] %vm328, %v1022
    %1122 = vst.msk [vmem:[%s1120] ss:$8 sm:$0x0] %vm328, %v1022
    %s1123 = scalar_lea.vmem [#allocation7], 181
    %1124 = vst.msk [vmem:[%s1123] ss:$8 sm:$0x3] %vm328, %v1024
    %1125 = vst.msk [vmem:[%s1123] ss:$8 sm:$0x0] %vm328, %v1024
    %s1126 = scalar_lea.vmem [#allocation7], 197
    %1127 = vst.msk [vmem:[%s1126] ss:$8 sm:$0x3] %vm328, %v1007
    %1128 = vst.msk [vmem:[%s1126] ss:$8 sm:$0x0] %vm328, %v1007
    %s1129 = scalar_lea.vmem [#allocation7], 213
    %1130 = vst.msk [vmem:[%s1129] ss:$8 sm:$0x3] %vm328, %v1021
    %1131 = vst.msk [vmem:[%s1129] ss:$8 sm:$0x0] %vm328, %v1021
    %s1132 = scalar_lea.vmem [#allocation7], 229
    %1133 = vst.msk [vmem:[%s1132] ss:$8 sm:$0x3] %vm328, %v1023
    %1134 = vst.msk [vmem:[%s1132] ss:$8 sm:$0x0] %vm328, %v1023
    %s1135 = scalar_lea.vmem [#allocation7], 245
    %1136 = vst.msk [vmem:[%s1135] ss:$8 sm:$0x3] %vm328, %v1025
    %1137 = vst.msk [vmem:[%s1135] ss:$8 sm:$0x0] %vm328, %v1025
    %v1138 = vld [vmem:[#allocation2 + $0x3] sm:$0x1]
    %v1139 = vld [vmem:[#allocation2 + $0x7] sm:$0x1]
    %v1140 = vld [vmem:[#allocation2 + $0xb] sm:$0x1]
    %v1141 = vld [vmem:[#allocation2 + $0xf] sm:$0x1]
    %v1142 = vld [vmem:[#allocation2 + $0x13] sm:$0x1]
    %v1143 = vld [vmem:[#allocation2 + $0x17] sm:$0x1]
    %v1144 = vld [vmem:[#allocation2 + $0x1b] sm:$0x1]
    %v1145 = vld [vmem:[#allocation2 + $0x1f] sm:$0x1]
    %v1146 = vld [vmem:[#allocation2 + $0x23] sm:$0x1]
    %v1147 = vld [vmem:[#allocation2 + $0x27] sm:$0x1]
    %v1148 = vld [vmem:[#allocation2 + $0x2b] sm:$0x1]
    %v1149 = vld [vmem:[#allocation2 + $0x2f] sm:$0x1]
    %v1150 = vld [vmem:[#allocation2 + $0x33] sm:$0x1]
    %v1151 = vld [vmem:[#allocation2 + $0x37] sm:$0x1]
    %v1152 = vld [vmem:[#allocation2 + $0x3b] sm:$0x1]
    %v1153 = vld [vmem:[#allocation2 + $0x3f] sm:$0x1]
    %v1170 = vrot.slane %v1139, 7
    %v1171 = vsel %vm89, %v1170, %v1138
    %v1172 = vrot.slane %v1140, 6
    %v1173 = vsel %vm92, %v1172, %v1171
    %v1174 = vrot.slane %v1141, 5
    %v1175 = vsel %vm95, %v1174, %v1173
    %v1176 = vrot.slane %v1142, 4
    %v1177 = vsel %vm98, %v1176, %v1175
    %v1178 = vrot.slane %v1143, 3
    %v1179 = vsel %vm101, %v1178, %v1177
    %v1180 = vrot.slane %v1144, 2
    %v1181 = vsel %vm104, %v1180, %v1179
    %v1182 = vrot.slane %v1145, 1
    %v1183 = vsel %vm107, %v1182, %v1181
    %v1184 = vrot.slane %v1147, 7
    %v1185 = vsel %vm89, %v1184, %v1146
    %v1186 = vrot.slane %v1148, 6
    %v1187 = vsel %vm92, %v1186, %v1185
    %v1188 = vrot.slane %v1149, 5
    %v1189 = vsel %vm95, %v1188, %v1187
    %v1190 = vrot.slane %v1150, 4
    %v1191 = vsel %vm98, %v1190, %v1189
    %v1192 = vrot.slane %v1151, 3
    %v1193 = vsel %vm101, %v1192, %v1191
    %v1194 = vrot.slane %v1152, 2
    %v1195 = vsel %vm104, %v1194, %v1193
    %v1196 = vrot.slane %v1153, 1
    %v1197 = vsel %vm107, %v1196, %v1195
    %v1198 = vsel %vm123, %v1183, 0
    %v1200 = vsel %vm123, %v1197, 0
    %1202 = vmatprep.subr.mxu0 %v41
    %1203 = vmatpush1.msra.mxu0 %v40
    %1204 = vmatprep.subr.mxu0 %v43
    %1205 = vmatpush1.msra.mxu0 %v42
    %1206 = vmatprep.subr.mxu0 %v45
    %1207 = vmatpush1.msra.mxu0 %v44
    %1208 = vmatprep.subr.mxu0 %v47
    %1209 = vmatpush1.msra.mxu0 %v46
    %1210 = vmatprep.subr.mxu0 %v49
    %1211 = vmatpush1.msra.mxu0 %v48
    %1212 = vmatprep.subr.mxu0 %v51
    %1213 = vmatpush1.msra.mxu0 %v50
    %1214 = vmatprep.subr.mxu0 %v53
    %1215 = vmatpush1.msra.mxu0 %v52
    %1216 = vmatprep.subr.mxu0 %v55
    %1217 = vmatpush1.msra.mxu0 %v54
    %1218 = vmatprep.subr.mxu0 0.0
    %1219 = vmatpush1.msra.mxu0 0.0
    %1220 = vmatprep.subr.mxu0 0.0
    %1221 = vmatpush1.msra.mxu0 0.0
    %1222 = vmatprep.subr.mxu0 0.0
    %1223 = vmatpush1.msra.mxu0 0.0
    %1224 = vmatprep.subr.mxu0 0.0
    %1225 = vmatpush1.msra.mxu0 0.0
    %1226 = vmatprep.subr.mxu0 0.0
    %1227 = vmatpush1.msra.mxu0 0.0
    %1228 = vmatprep.subr.mxu0 0.0
    %1229 = vmatpush1.msra.mxu0 0.0
    %1230 = vmatprep.subr.mxu0 0.0
    %1231 = vmatpush1.msra.mxu0 0.0
    %1232 = vmatprep.subr.mxu0 0.0
    %1233 = vmatpush1.msra.mxu0 0.0
    %1234 = vmatprep.subr.mxu0 0.0
    %1235 = vmatpush1.msra.mxu0 0.0
    %1236 = vmatprep.subr.mxu0 0.0
    %1237 = vmatpush1.msra.mxu0 0.0
    %1238 = vmatprep.subr.mxu0 0.0
    %1239 = vmatpush1.msra.mxu0 0.0
    %1240 = vmatprep.subr.mxu0 0.0
    %1241 = vmatpush1.msra.mxu0 0.0
    %1242 = vmatprep.subr.mxu0 0.0
    %1243 = vmatpush1.msra.mxu0 0.0
    %1244 = vmatprep.subr.mxu0 0.0
    %1245 = vmatpush1.msra.mxu0 0.0
    %1246 = vmatprep.subr.mxu0 0.0
    %1247 = vmatpush1.msra.mxu0 0.0
    %1248 = vmatprep.subr.mxu0 0.0
    %1249 = vmatpush1.msra.mxu0 0.0
    %1250 = vmatprep.subr.mxu0 0.0
    %1251 = vmatpush1.msra.mxu0 0.0
    %1252 = vmatprep.subr.mxu0 0.0
    %1253 = vmatpush1.msra.mxu0 0.0
    %1254 = vmatprep.subr.mxu0 0.0
    %1255 = vmatpush1.msra.mxu0 0.0
    %1256 = vmatprep.subr.mxu0 0.0
    %1257 = vmatpush1.msra.mxu0 0.0
    %1258 = vmatprep.subr.mxu0 0.0
    %1259 = vmatpush1.msra.mxu0 0.0
    %1260 = vmatprep.subr.mxu0 0.0
    %1261 = vmatpush1.msra.mxu0 0.0
    %1262 = vmatprep.subr.mxu0 0.0
    %1263 = vmatpush1.msra.mxu0 0.0
    %1264 = vmatprep.subr.mxu0 0.0
    %1265 = vmatpush1.msra.mxu0 0.0
    %1266 = vmatprep.mubr.f32.mxu0 0.0
    %1267 = vmatmul.mubr.f32.gmra.mrb[0].mxu0 %v1198
    %v1268 = vpop.f32.mrb[0].mxu0
    %v1269 = vadd.f32 0.0, %v1268
    %v1270 = vpop.f32.mrb[0].mxu0
    %v1271 = vadd.f32 0.0, %v1270
    %1272 = vmatprep.mubr.f32.mxu0 0.0
    %1273 = vmatmul.mubr.f32.gmra.mrb[0].mxu0 %v1200
    %v1274 = vpop.f32.mrb[0].mxu0
    %v1275 = vadd.f32 0.0, %v1274
    %v1276 = vpop.f32.mrb[0].mxu0
    %v1277 = vadd.f32 0.0, %v1276
    %1278 = vdwg.mxu0
    %v1283 = vcombine.low %v1269, %v1271
    %v1284 = vcombine.high %v1269, %v1271
    %v1286 = vunpack.c.l.s4 1966171168
    %v1287 = vunpack.c.0.s8 %v1286
    %v1288 = vlaneseq
    %v1289 = vshrl.u32 %v1288, 7
    %v1290 = vsub.s32 %v1287, %v1289
    %v1291 = vrot.slane %v1283, %v1290
    %v1293 = vunpack.c.l.s4 1966171168
    %v1294 = vunpack.c.0.s8 %v1293
    %v1295 = vlaneseq
    %v1296 = vshrl.u32 %v1295, 7
    %v1297 = vsub.s32 %v1294, %v1296
    %v1298 = vrot.slane %v1284, %v1297
    %v1299 = vcombine.high %v1291, %v1291
    %v1300 = vcombine.high %v1298, %v1298
    %v1302 = vunpack.c.l.s4 1966171168
    %v1303 = vunpack.c.0.s8 %v1302
    %v1304 = vlaneseq
    %v1305 = vshrl.u32 %v1304, 7
    %v1306 = vsub.s32 %v1303, %v1305
    %v1307 = vrot.slane %v1291, %v1306
    %v1309 = vunpack.c.l.s4 1966171168
    %v1310 = vunpack.c.0.s8 %v1309
    %v1311 = vlaneseq
    %v1312 = vshrl.u32 %v1311, 7
    %v1313 = vsub.s32 %v1310, %v1312
    %v1314 = vrot.slane %v1298, %v1313
    %v1316 = vunpack.c.l.s4 1966171168
    %v1317 = vunpack.c.0.s8 %v1316
    %v1318 = vlaneseq
    %v1319 = vshrl.u32 %v1318, 7
    %v1320 = vsub.s32 %v1317, %v1319
    %v1321 = vrot.slane %v1299, %v1320
    %v1323 = vunpack.c.l.s4 1966171168
    %v1324 = vunpack.c.0.s8 %v1323
    %v1325 = vlaneseq
    %v1326 = vshrl.u32 %v1325, 7
    %v1327 = vsub.s32 %v1324, %v1326
    %v1328 = vrot.slane %v1300, %v1327
    %v1329 = vcombine.high %v1307, %v1307
    %v1330 = vcombine.high %v1314, %v1314
    %v1331 = vcombine.high %v1321, %v1321
    %v1332 = vcombine.high %v1328, %v1328
    %v1333 = vcombine.low %v1275, %v1277
    %v1334 = vcombine.high %v1275, %v1277
    %v1336 = vunpack.c.l.s4 1966171168
    %v1337 = vunpack.c.0.s8 %v1336
    %v1338 = vlaneseq
    %v1339 = vshrl.u32 %v1338, 7
    %v1340 = vsub.s32 %v1337, %v1339
    %v1341 = vrot.slane %v1333, %v1340
    %v1343 = vunpack.c.l.s4 1966171168
    %v1344 = vunpack.c.0.s8 %v1343
    %v1345 = vlaneseq
    %v1346 = vshrl.u32 %v1345, 7
    %v1347 = vsub.s32 %v1344, %v1346
    %v1348 = vrot.slane %v1334, %v1347
    %v1349 = vcombine.high %v1341, %v1341
    %v1350 = vcombine.high %v1348, %v1348
    %v1352 = vunpack.c.l.s4 1966171168
    %v1353 = vunpack.c.0.s8 %v1352
    %v1354 = vlaneseq
    %v1355 = vshrl.u32 %v1354, 7
    %v1356 = vsub.s32 %v1353, %v1355
    %v1357 = vrot.slane %v1341, %v1356
    %v1359 = vunpack.c.l.s4 1966171168
    %v1360 = vunpack.c.0.s8 %v1359
    %v1361 = vlaneseq
    %v1362 = vshrl.u32 %v1361, 7
    %v1363 = vsub.s32 %v1360, %v1362
    %v1364 = vrot.slane %v1348, %v1363
    %v1366 = vunpack.c.l.s4 1966171168
    %v1367 = vunpack.c.0.s8 %v1366
    %v1368 = vlaneseq
    %v1369 = vshrl.u32 %v1368, 7
    %v1370 = vsub.s32 %v1367, %v1369
    %v1371 = vrot.slane %v1349, %v1370
    %v1373 = vunpack.c.l.s4 1966171168
    %v1374 = vunpack.c.0.s8 %v1373
    %v1375 = vlaneseq
    %v1376 = vshrl.u32 %v1375, 7
    %v1377 = vsub.s32 %v1374, %v1376
    %v1378 = vrot.slane %v1350, %v1377
    %v1379 = vcombine.high %v1357, %v1357
    %v1380 = vcombine.high %v1364, %v1364
    %v1381 = vcombine.high %v1371, %v1371
    %v1382 = vcombine.high %v1378, %v1378
    %s1399 = scalar_lea.vmem [#allocation7], 6
    %1400 = vst.msk [vmem:[%s1399] ss:$8 sm:$0x3] %vm328, %v1307
    %1401 = vst.msk [vmem:[%s1399] ss:$8 sm:$0x0] %vm328, %v1307
    %s1402 = scalar_lea.vmem [#allocation7], 22
    %1403 = vst.msk [vmem:[%s1402] ss:$8 sm:$0x3] %vm328, %v1321
    %1404 = vst.msk [vmem:[%s1402] ss:$8 sm:$0x0] %vm328, %v1321
    %s1405 = scalar_lea.vmem [#allocation7], 38
    %1406 = vst.msk [vmem:[%s1405] ss:$8 sm:$0x3] %vm328, %v1329
    %1407 = vst.msk [vmem:[%s1405] ss:$8 sm:$0x0] %vm328, %v1329
    %s1408 = scalar_lea.vmem [#allocation7], 54
    %1409 = vst.msk [vmem:[%s1408] ss:$8 sm:$0x3] %vm328, %v1331
    %1410 = vst.msk [vmem:[%s1408] ss:$8 sm:$0x0] %vm328, %v1331
    %s1411 = scalar_lea.vmem [#allocation7], 70
    %1412 = vst.msk [vmem:[%s1411] ss:$8 sm:$0x3] %vm328, %v1314
    %1413 = vst.msk [vmem:[%s1411] ss:$8 sm:$0x0] %vm328, %v1314
    %s1414 = scalar_lea.vmem [#allocation7], 86
    %1415 = vst.msk [vmem:[%s1414] ss:$8 sm:$0x3] %vm328, %v1328
    %1416 = vst.msk [vmem:[%s1414] ss:$8 sm:$0x0] %vm328, %v1328
    %s1417 = scalar_lea.vmem [#allocation7], 102
    %1418 = vst.msk [vmem:[%s1417] ss:$8 sm:$0x3] %vm328, %v1330
    %1419 = vst.msk [vmem:[%s1417] ss:$8 sm:$0x0] %vm328, %v1330
    %s1420 = scalar_lea.vmem [#allocation7], 118
    %1421 = vst.msk [vmem:[%s1420] ss:$8 sm:$0x3] %vm328, %v1332
    %1422 = vst.msk [vmem:[%s1420] ss:$8 sm:$0x0] %vm328, %v1332
    %s1423 = scalar_lea.vmem [#allocation7], 134
    %1424 = vst.msk [vmem:[%s1423] ss:$8 sm:$0x3] %vm328, %v1357
    %1425 = vst.msk [vmem:[%s1423] ss:$8 sm:$0x0] %vm328, %v1357
    %s1426 = scalar_lea.vmem [#allocation7], 150
    %1427 = vst.msk [vmem:[%s1426] ss:$8 sm:$0x3] %vm328, %v1371
    %1428 = vst.msk [vmem:[%s1426] ss:$8 sm:$0x0] %vm328, %v1371
    %s1429 = scalar_lea.vmem [#allocation7], 166
    %1430 = vst.msk [vmem:[%s1429] ss:$8 sm:$0x3] %vm328, %v1379
    %1431 = vst.msk [vmem:[%s1429] ss:$8 sm:$0x0] %vm328, %v1379
    %s1432 = scalar_lea.vmem [#allocation7], 182
    %1433 = vst.msk [vmem:[%s1432] ss:$8 sm:$0x3] %vm328, %v1381
    %1434 = vst.msk [vmem:[%s1432] ss:$8 sm:$0x0] %vm328, %v1381
    %s1435 = scalar_lea.vmem [#allocation7], 198
    %1436 = vst.msk [vmem:[%s1435] ss:$8 sm:$0x3] %vm328, %v1364
    %1437 = vst.msk [vmem:[%s1435] ss:$8 sm:$0x0] %vm328, %v1364
    %s1438 = scalar_lea.vmem [#allocation7], 214
    %1439 = vst.msk [vmem:[%s1438] ss:$8 sm:$0x3] %vm328, %v1378
    %1440 = vst.msk [vmem:[%s1438] ss:$8 sm:$0x0] %vm328, %v1378
    %s1441 = scalar_lea.vmem [#allocation7], 230
    %1442 = vst.msk [vmem:[%s1441] ss:$8 sm:$0x3] %vm328, %v1380
    %1443 = vst.msk [vmem:[%s1441] ss:$8 sm:$0x0] %vm328, %v1380
    %s1444 = scalar_lea.vmem [#allocation7], 246
    %1445 = vst.msk [vmem:[%s1444] ss:$8 sm:$0x3] %vm328, %v1382
    %1446 = vst.msk [vmem:[%s1444] ss:$8 sm:$0x0] %vm328, %v1382
    %s1447 = scalar_lea.vmem [#allocation7], 7
    %1448 = vst.msk [vmem:[%s1447] ss:$8 sm:$0x3] %vm328, %v1307
    %1449 = vst.msk [vmem:[%s1447] ss:$8 sm:$0x0] %vm328, %v1307
    %s1450 = scalar_lea.vmem [#allocation7], 23
    %1451 = vst.msk [vmem:[%s1450] ss:$8 sm:$0x3] %vm328, %v1321
    %1452 = vst.msk [vmem:[%s1450] ss:$8 sm:$0x0] %vm328, %v1321
    %s1453 = scalar_lea.vmem [#allocation7], 39
    %1454 = vst.msk [vmem:[%s1453] ss:$8 sm:$0x3] %vm328, %v1329
    %1455 = vst.msk [vmem:[%s1453] ss:$8 sm:$0x0] %vm328, %v1329
    %s1456 = scalar_lea.vmem [#allocation7], 55
    %1457 = vst.msk [vmem:[%s1456] ss:$8 sm:$0x3] %vm328, %v1331
    %1458 = vst.msk [vmem:[%s1456] ss:$8 sm:$0x0] %vm328, %v1331
    %s1459 = scalar_lea.vmem [#allocation7], 71
    %1460 = vst.msk [vmem:[%s1459] ss:$8 sm:$0x3] %vm328, %v1314
    %1461 = vst.msk [vmem:[%s1459] ss:$8 sm:$0x0] %vm328, %v1314
    %s1462 = scalar_lea.vmem [#allocation7], 87
    %1463 = vst.msk [vmem:[%s1462] ss:$8 sm:$0x3] %vm328, %v1328
    %1464 = vst.msk [vmem:[%s1462] ss:$8 sm:$0x0] %vm328, %v1328
    %s1465 = scalar_lea.vmem [#allocation7], 103
    %1466 = vst.msk [vmem:[%s1465] ss:$8 sm:$0x3] %vm328, %v1330
    %1467 = vst.msk [vmem:[%s1465] ss:$8 sm:$0x0] %vm328, %v1330
    %s1468 = scalar_lea.vmem [#allocation7], 119
    %1469 = vst.msk [vmem:[%s1468] ss:$8 sm:$0x3] %vm328, %v1332
    %1470 = vst.msk [vmem:[%s1468] ss:$8 sm:$0x0] %vm328, %v1332
    %s1471 = scalar_lea.vmem [#allocation7], 135
    %1472 = vst.msk [vmem:[%s1471] ss:$8 sm:$0x3] %vm328, %v1357
    %1473 = vst.msk [vmem:[%s1471] ss:$8 sm:$0x0] %vm328, %v1357
    %s1474 = scalar_lea.vmem [#allocation7], 151
    %1475 = vst.msk [vmem:[%s1474] ss:$8 sm:$0x3] %vm328, %v1371
    %1476 = vst.msk [vmem:[%s1474] ss:$8 sm:$0x0] %vm328, %v1371
    %s1477 = scalar_lea.vmem [#allocation7], 167
    %1478 = vst.msk [vmem:[%s1477] ss:$8 sm:$0x3] %vm328, %v1379
    %1479 = vst.msk [vmem:[%s1477] ss:$8 sm:$0x0] %vm328, %v1379
    %s1480 = scalar_lea.vmem [#allocation7], 183
    %1481 = vst.msk [vmem:[%s1480] ss:$8 sm:$0x3] %vm328, %v1381
    %1482 = vst.msk [vmem:[%s1480] ss:$8 sm:$0x0] %vm328, %v1381
    %s1483 = scalar_lea.vmem [#allocation7], 199
    %1484 = vst.msk [vmem:[%s1483] ss:$8 sm:$0x3] %vm328, %v1364
    %1485 = vst.msk [vmem:[%s1483] ss:$8 sm:$0x0] %vm328, %v1364
    %s1486 = scalar_lea.vmem [#allocation7], 215
    %1487 = vst.msk [vmem:[%s1486] ss:$8 sm:$0x3] %vm328, %v1378
    %1488 = vst.msk [vmem:[%s1486] ss:$8 sm:$0x0] %vm328, %v1378
    %s1489 = scalar_lea.vmem [#allocation7], 231
    %1490 = vst.msk [vmem:[%s1489] ss:$8 sm:$0x3] %vm328, %v1380
    %1491 = vst.msk [vmem:[%s1489] ss:$8 sm:$0x0] %vm328, %v1380
    %s1492 = scalar_lea.vmem [#allocation7], 247
    %1493 = vst.msk [vmem:[%s1492] ss:$8 sm:$0x3] %vm328, %v1382
    %1494 = vst.msk [vmem:[%s1492] ss:$8 sm:$0x0] %vm328, %v1382
    // Predicated region
    $region18: #{tpu_custom_call.1} parent=1 // pred_check
      _
    $region19: #{tpu_custom_call.1} parent=1 // pred_check_branch
      %1496 = sbr.rel (0) target = $region21
    $region20: #{tpu_custom_call.1} parent=1 // pred_region
      %s1498 = ssub.s32 4096, 4096
      %1499 = vsyncadd [#allocation4], %s1498
      %s1500 = sshll.u32 [#allocation7], 4
      %s1501 = int_to_ptr.vmem [resolvable:$true] %s1500
      %1506 = dma.vmem_to_hbm [thread:$0]  %s1501, 4096, %s2, [#allocation4], 256, 256, 16
    $region21: #{tpu_custom_call.1} parent=1 // pred_fallthru
      _
    // Predicated region
    $region22: #{tpu_custom_call.1} parent=1 // pred_check
      _
    $region23: #{tpu_custom_call.1} parent=1 // pred_check_branch
      %1508 = sbr.rel (0) target = $region25
    $region24: #{tpu_custom_call.1} parent=1 // pred_region
      %1509 = dma.done [#allocation4], 4096
    $region25: #{tpu_custom_call.1} parent=1 // pred_fallthru
      _
    %1510 = vsyncpa [#allocation3], 1
    %1511 = vsyncpa [#allocation6], 1
    %1512 = vsyncpa [#allocation4], 1

</llo_original>
